<compile_context>
chip_gen: v7x
topology: tpu7x:2x2x1
jax: 0.10.0
libtpu: 0.0.40
codegen_flags: <defaults>
</compile_context>

<pallas_src>
import functools

import jax
import jax.numpy as jnp
from jax.experimental import pallas as pl
from jax.experimental.pallas import tpu as pltpu

D_EMB = 128   # word-embedding dim
HID   = 128   # news / user embedding dim
SEQ   = 16    # tokens per news title
HIST  = 8     # history length per user
VOCAB = 100   # vocabulary size

MAX_BATCH_TILE = 64             # rows per news-encoder grid step (M = 64*SEQ = 1024)
COMPUTE_DTYPE = jnp.bfloat16    # MXU operand dtype; accumulation stays f32
VMEM_LIMIT_BYTES = 32 * 1024 * 1024


# ------------------------------ small helpers -------------------------------

def _round_up(x, m):
    return (x + m - 1) // m * m


def _device_kind():
    try:
        return jax.devices()[0].device_kind.lower()
    except Exception:
        return ""


def _elementwise_dtype():
    """bf16 tanh on v6e/v7x (bf16 EUP); f32 on v5e and older (no bf16 VPU/EUP)."""
    kind = _device_kind()
    if any(t in kind for t in ("v2", "v3", "v4", "v5")):
        return jnp.float32
    return jnp.bfloat16


def _multi_tensorcore():
    """v7x exposes 2 TensorCores per chip; v5e/v6e have 1."""
    kind = _device_kind()
    return ("v7" in kind) or ("7x" in kind)


def _pick_tile(n, max_tile=MAX_BATCH_TILE):
    """(batch_tile, padded_n): tiles are multiples of 8; small batches are split into
    >=2 grid steps only on multi-TensorCore parts (v7x)."""
    n = max(int(n), 1)
    n8 = _round_up(n, 8)
    steps = max(-(-n8 // max_tile), 1)
    if _multi_tensorcore() and n8 >= 16:
        steps = max(steps, 2)
    tile = _round_up(-(-n8 // steps), 8)
    return tile, tile * steps


def _pick_user_tile(u):
    """User tile for the scoring kernel. The transposed (N_CAND, ut) output block needs
    ut == u_pad (single step) or ut a multiple of 128."""
    u8 = _round_up(max(int(u), 1), 8)
    if u8 <= 256:
        return u8, u8                       # one grid step, block == full array
    return 128, _round_up(u8, 128)


# ----------------------------- Pallas kernels ------------------------------

def _news_encoder_kernel(ids_ref, pt_ref, b_ref, q_ref, o_ref, *, seq_len, ew_dtype):
    """ids:(bt,S) i32   pt:(V,H) bf16 (= word_emb @ news_w)   b,q:(1,H) f32  ->  o:(bt,H) f32.

    proj = tanh(one_hot(ids) @ pt + b);  a = softmax(proj . q over S);  o = sum_s a_s proj_s
    (Additive attention pools proj = tanh(xW+b); the gather/projection fold relies on x not
    being pooled directly.)
    """
    ids = ids_ref[...]                                     # (bt, S) int32, lane-dense block
    pt = pt_ref[...]                                       # (V, H) bf16
    bt = ids.shape[0]
    v, h = pt.shape

    # Exact embedding-gather + projection in ONE MXU matmul: one_hot(ids) @ (word_emb @ W).
    iota = jax.lax.broadcasted_iota(jnp.int32, (bt, seq_len, v), 2)
    one_hot = (ids[:, :, None] == iota).astype(pt.dtype)   # (bt, S, V)
    proj_pre = jnp.dot(one_hot.reshape(bt * seq_len, v), pt,
                       preferred_element_type=jnp.float32) # (M, H) f32 accumulate
    proj_pre = proj_pre + b_ref[...]
    # Chip-gated elementwise dtype: bf16 EUP tanh on v6e/v7x, f32 on v5e.
    proj = jnp.tanh(proj_pre.astype(ew_dtype)).astype(jnp.float32)
    proj = proj.reshape(bt, seq_len, h)                    # (bt, S, H)

    # Additive attention pooling over title tokens (f32 softmax / pooling).
    # TODO(synk): if VALU/XLU saturate on v6e, move this dot to the idle MXU (q padded to (H,8)).
    att = jnp.sum(proj * q_ref[...][None, :, :], axis=-1)  # (bt, S)
    att = att - jnp.max(att, axis=-1, keepdims=True)
    e = jnp.exp(att)
    att = e * pl.reciprocal(jnp.sum(e, axis=-1, keepdims=True), approx=True)
    o_ref[...] = jnp.sum(att[:, :, None] * proj, axis=1).astype(o_ref.dtype)


def _user_score_kernel(hist_ref, cand_t_ref, w_ref, b_ref, q_ref, o_ref, *, ew_dtype):
    """hist:(ut,L,H) f32  cand_t:(NC,ut,H) f32  w:(H,H) bf16  b,q:(1,H)  ->  o:(NC,ut) f32.

    User additive attention over history news embeddings, fused with the per-user
    user . candidate^T scoring epilogue.  Output is transposed (lane dim = users) so the
    final store is lane-dense instead of a masked NC-wide partial store.
    """
    hist = hist_ref[...]                                   # (ut, L, H) f32
    ut, l, h = hist.shape
    w = w_ref[...]                                         # (H, H) bf16

    pre = jnp.dot(hist.reshape(ut * l, h).astype(w.dtype), w,
                  preferred_element_type=jnp.float32) + b_ref[...]
    proj = jnp.tanh(pre.astype(ew_dtype)).astype(jnp.float32).reshape(ut, l, h)

    att = jnp.sum(proj * q_ref[...][None, :, :], axis=-1)  # (ut, L)
    att = att - jnp.max(att, axis=-1, keepdims=True)
    e = jnp.exp(att)
    att = e * pl.reciprocal(jnp.sum(e, axis=-1, keepdims=True), approx=True)
    user = jnp.sum(att[:, :, None] * proj, axis=1)         # (ut, H) f32

    # scores_T[j, u] = <user[u], cand[u, j]>   (lane-dense (NC, ut) store)
    o_ref[...] = jnp.sum(cand_t_ref[...] * user[None, :, :],
                         axis=-1).astype(o_ref.dtype)


# ------------------------------- wrappers -----------------------------------

def encode_news(params, token_ids, *, compute_dtype=COMPUTE_DTYPE,
                max_tile=MAX_BATCH_TILE):
    """token_ids: (N, S) int32 -> (N, HID) float32 news embeddings."""
    n, s = token_ids.shape
    v, _ = params['word_emb'].shape
    h = params['news_w'].shape[1]
    bt, n_pad = _pick_tile(n, max_tile)
    ew_dtype = _elementwise_dtype()

    # Padded rows use token id 0 (a real row) -- harmless, padded outputs are sliced off.
    ids = jnp.pad(token_ids, ((0, n_pad - n), (0, 0))).astype(jnp.int32)   # (n_pad, S)

    # Fold the embedding gather and the projection: proj_table = word_emb @ news_w (f32),
    # cast once to bf16.  The in-kernel one-hot row-select of these bf16 rows is exact.
    v_pad = _round_up(v, 128)
    proj_table = jnp.dot(params['word_emb'], params['news_w'],
                         preferred_element_type=jnp.float32)
    proj_table = jnp.pad(proj_table, ((0, v_pad - v), (0, 0))).astype(compute_dtype)

    out = pl.pallas_call(
        functools.partial(_news_encoder_kernel, seq_len=s, ew_dtype=ew_dtype),
        out_shape=jax.ShapeDtypeStruct((n_pad, h), jnp.float32),
        grid=(n_pad // bt,),
        in_specs=[
            pl.BlockSpec((bt, s), lambda i: (i, 0)),       # token ids, lane-dense block
            pl.BlockSpec((v_pad, h), lambda i: (0, 0)),    # folded projection table (VMEM resident)
            pl.BlockSpec((1, h), lambda i: (0, 0)),        # bias
            pl.BlockSpec((1, h), lambda i: (0, 0)),        # attention query
        ],
        out_specs=pl.BlockSpec((bt, h), lambda i: (i, 0)),
        compiler_params=pltpu.CompilerParams(
            dimension_semantics=("parallel",),
            vmem_limit_bytes=VMEM_LIMIT_BYTES),
    )(ids, proj_table, params['news_b'], params['news_q'])
    return out[:n]


def user_pool_and_score(params, hist_emb, cand_emb, *, compute_dtype=COMPUTE_DTYPE):
    """hist_emb:(U,L,H) f32, cand_emb:(U,NC,H) f32 -> scores:(U,NC) f32."""
    u, l, h = hist_emb.shape
    _, nc, _ = cand_emb.shape
    ut, u_pad = _pick_user_tile(u)
    ew_dtype = _elementwise_dtype()

    hist = jnp.pad(hist_emb, ((0, u_pad - u), (0, 0), (0, 0)))
    cand = jnp.pad(cand_emb, ((0, u_pad - u), (0, 0), (0, 0)))
    cand_t = jnp.transpose(cand, (1, 0, 2))                # (NC, U_pad, H): lane-dense out
    w = params['user_w'].astype(compute_dtype)

    scores_t = pl.pallas_call(
        functools.partial(_user_score_kernel, ew_dtype=ew_dtype),
        out_shape=jax.ShapeDtypeStruct((nc, u_pad), jnp.float32),
        grid=(u_pad // ut,),
        in_specs=[
            pl.BlockSpec((ut, l, h), lambda i: (i, 0, 0)),
            pl.BlockSpec((nc, ut, h), lambda i: (0, i, 0)),
            pl.BlockSpec((h, h), lambda i: (0, 0)),
            pl.BlockSpec((1, h), lambda i: (0, 0)),
            pl.BlockSpec((1, h), lambda i: (0, 0)),
        ],
        out_specs=pl.BlockSpec((nc, ut), lambda i: (0, i)),
        compiler_params=pltpu.CompilerParams(
            dimension_semantics=("parallel",),
            vmem_limit_bytes=VMEM_LIMIT_BYTES),
    )(hist, cand_t, w, params['user_b'], params['user_q'])
    return scores_t[:, :u].T                               # (U, NC)


# ------------------------- NewsRecommendationModel -------------------------

def news_recommendation_forward(params, candidates, histories,
                                n_candidates_per_user,
                                *, compute_dtype=COMPUTE_DTYPE):
    """Mirrors NewsRecommendationModel.forward (equal int split).

    candidates: (U * n, SEQ) int32 token ids, user-major order
    histories:  (U, HIST, SEQ) int32 token ids
    returns:    (U * n,) float32 scores == torch.hstack([...]).flatten()
    """
    # TODO(synk): ragged per-user candidate counts (list-valued torch split) would need a
    # scalar-prefetch index_map; only the equal-split (int) case is implemented.
    u, l, s = histories.shape
    n = int(n_candidates_per_user)
    n_cand = candidates.shape[0]

    # One fused news-encoder pass over candidate + history titles.
    all_tokens = jnp.concatenate([candidates, histories.reshape(u * l, s)], axis=0)
    all_emb = encode_news(params, all_tokens, compute_dtype=compute_dtype)
    h = all_emb.shape[1]
    cand_emb = all_emb[:n_cand].reshape(u, n, h)           # equal split, user-major
    hist_emb = all_emb[n_cand:n_cand + u * l].reshape(u, l, h)

    # User encoding fused with scoring.
    scores = user_pool_and_score(params, hist_emb, cand_emb,
                                 compute_dtype=compute_dtype)
    return scores.reshape(-1)


# ----------------------------- Reference (jnp) ------------------------------

def ref_forward(params, candidates, histories, n, compute_dtype=COMPUTE_DTYPE):
    """Pure-jnp reference mirroring the kernel's mixed-precision contract
    (bf16 folded proj table / MXU operands, chip-gated elementwise dtype, f32 accumulation)."""
    ew_dtype = _elementwise_dtype()
    proj_table = jnp.dot(params['word_emb'], params['news_w'],
                         preferred_element_type=jnp.float32)
    proj_table = proj_table.astype(compute_dtype).astype(jnp.float32)

    def news_pool(tok):
        pre = proj_table[tok] + params['news_b'][None]
        proj = jnp.tanh(pre.astype(ew_dtype)).astype(jnp.float32)
        a = jax.nn.softmax(jnp.sum(proj * params['news_q'][None], axis=-1), axis=-1)
        return jnp.sum(a[:, :, None] * proj, axis=1)

    def user_pool(x):
        pre = jnp.einsum('bsd,dh->bsh', x.astype(compute_dtype),
                         params['user_w'].astype(compute_dtype),
                         preferred_element_type=jnp.float32) + params['user_b'][None]
        proj = jnp.tanh(pre.astype(ew_dtype)).astype(jnp.float32)
        a = jax.nn.softmax(jnp.sum(proj * params['user_q'][None], axis=-1), axis=-1)
        return jnp.sum(a[:, :, None] * proj, axis=1)

    cand_emb = news_pool(candidates)
    u, l, s = histories.shape
    hist = news_pool(histories.reshape(u * l, s)).reshape(u, l, -1)
    user_emb = user_pool(hist)
    cand_pu = cand_emb.reshape(u, n, -1)
    return jnp.einsum('uh,unh->un', user_emb, cand_pu).reshape(-1)


# --------------------------------- Params -----------------------------------

def init_params(key):
    ks = jax.random.split(key, 7)
    s = 0.1
    return {
        'word_emb': s * jax.random.normal(ks[0], (VOCAB, D_EMB), jnp.float32),
        'news_w':   s * jax.random.normal(ks[1], (D_EMB, HID), jnp.float32),
        'news_b':   s * jax.random.normal(ks[2], (1, HID), jnp.float32),
        'news_q':   s * jax.random.normal(ks[3], (1, HID), jnp.float32),
        'user_w':   s * jax.random.normal(ks[4], (HID, HID), jnp.float32),
        'user_b':   s * jax.random.normal(ks[5], (1, HID), jnp.float32),
        'user_q':   s * jax.random.normal(ks[6], (1, HID), jnp.float32),
    }


if __name__ == "__main__":
    params = init_params(jax.random.PRNGKey(0))

    U = 2                      # users in batch
    n_cand = 4                 # candidates per user
    kc, kh = jax.random.split(jax.random.PRNGKey(0))
    candidates = jax.random.randint(kc, (U * n_cand, SEQ), 0, VOCAB,
                                    dtype=jnp.int32)
    histories = jax.random.randint(kh, (U, HIST, SEQ), 0, VOCAB,
                                   dtype=jnp.int32)

    fwd = jax.jit(lambda p, c, h: news_recommendation_forward(p, c, h, n_cand))
    out = jax.block_until_ready(fwd(params, candidates, histories))

    ref = ref_forward(params, candidates, histories, n_cand)
    assert out.shape == (U * n_cand,)
    # bf16 folded proj table + (chip-gated) bf16 EUP tanh + EUP-approx reciprocal -> modest tolerance.
    assert jnp.allclose(out, ref, atol=3e-3, rtol=3e-3), (out, ref)

    print("KERNEL_OK")
</pallas_src>

<mosaic_0001>
module attributes {stable_mosaic.version = 11 : i64} {
  func.func @_news_encoder_kernel(%arg0: i32, %arg1: memref<24x16xi32, #tpu.memory_space<vmem>>, %arg2: memref<128x128xbf16, #tpu.memory_space<vmem>>, %arg3: memref<1x128xf32, #tpu.memory_space<vmem>>, %arg4: memref<1x128xf32, #tpu.memory_space<vmem>>, %arg5: memref<24x128xf32, #tpu.memory_space<vmem>>) attributes {dimension_semantics = [#tpu.dimension_semantics<parallel>], iteration_bounds = array<i64: 1>, scalar_prefetch = 0 : i64, scratch_operands = 0 : i64, tpu.core_type = #tpu.core_type<tc>, window_params = [{transform_indices = @transform_0, window_bounds = array<i64: 24, 16>}, {pipeline_mode = #tpu.pipeline_mode<synchronous>, transform_indices = @transform_1, window_bounds = array<i64: 128, 128>}, {pipeline_mode = #tpu.pipeline_mode<synchronous>, transform_indices = @transform_2, window_bounds = array<i64: 1, 128>}, {pipeline_mode = #tpu.pipeline_mode<synchronous>, transform_indices = @transform_3, window_bounds = array<i64: 1, 128>}, {transform_indices = @transform_4, window_bounds = array<i64: 24, 128>}]} {
    %c0 = arith.constant 0 : index
    %c0_0 = arith.constant 0 : index
    %0 = vector.load %arg1[%c0, %c0_0] : memref<24x16xi32, #tpu.memory_space<vmem>>, vector<24x16xi32>
    %c0_1 = arith.constant 0 : index
    %c0_2 = arith.constant 0 : index
    %1 = vector.load %arg2[%c0_1, %c0_2] : memref<128x128xbf16, #tpu.memory_space<vmem>>, vector<128x128xbf16>
    %2 = tpu.iota {dimensions = array<i32: 2>} : vector<24x16x128xi32>
    %3 = vector.shape_cast %0 : vector<24x16xi32> to vector<24x16x1xi32>
    %4 = vector.broadcast %3 : vector<24x16x1xi32> to vector<24x16x128xi32>
    %5 = arith.cmpi eq, %4, %2 : vector<24x16x128xi32>
    %6 = arith.extui %5 : vector<24x16x128xi1> to vector<24x16x128xi32>
    %7 = arith.sitofp %6 : vector<24x16x128xi32> to vector<24x16x128xf32>
    %8 = arith.truncf %7 : vector<24x16x128xf32> to vector<24x16x128xbf16>
    %9 = vector.shape_cast %8 : vector<24x16x128xbf16> to vector<384x128xbf16>
    %cst = arith.constant dense<0.000000e+00> : vector<384x128xf32>
    %10 = tpu.matmul %9, %1, %cst {dimension_numbers = #tpu.dot_dimension_numbers<[1], [0], [0], [1], [0, 0, 1, 1], [], []>} : vector<384x128xbf16>, vector<128x128xbf16>, vector<384x128xf32> -> vector<384x128xf32>
    %c0_3 = arith.constant 0 : index
    %c0_4 = arith.constant 0 : index
    %11 = vector.load %arg3[%c0_3, %c0_4] : memref<1x128xf32, #tpu.memory_space<vmem>>, vector<1x128xf32>
    %12 = vector.broadcast %11 : vector<1x128xf32> to vector<384x128xf32>
    %13 = arith.addf %10, %12 : vector<384x128xf32>
    %14 = arith.truncf %13 : vector<384x128xf32> to vector<384x128xbf16>
    %15 = math.tanh %14 : vector<384x128xbf16>
    %16 = arith.extf %15 : vector<384x128xbf16> to vector<384x128xf32>
    %17 = vector.shape_cast %16 : vector<384x128xf32> to vector<24x16x128xf32>
    %c0_5 = arith.constant 0 : index
    %c0_6 = arith.constant 0 : index
    %18 = vector.load %arg4[%c0_5, %c0_6] : memref<1x128xf32, #tpu.memory_space<vmem>>, vector<1x128xf32>
    %19 = vector.shape_cast %18 : vector<1x128xf32> to vector<1x1x128xf32>
    %20 = vector.broadcast %19 : vector<1x1x128xf32> to vector<24x16x128xf32>
    %21 = arith.mulf %17, %20 : vector<24x16x128xf32>
    %cst_7 = arith.constant dense<0.000000e+00> : vector<24x16xf32>
    %22 = vector.multi_reduction <add>, %21, %cst_7 [2] : vector<24x16x128xf32> to vector<24x16xf32>
    %cst_8 = arith.constant dense<0xFF800000> : vector<24xf32>
    %23 = vector.multi_reduction <maximumf>, %22, %cst_8 [1] : vector<24x16xf32> to vector<24xf32>
    %24 = vector.shape_cast %23 : vector<24xf32> to vector<24x1xf32>
    %25 = vector.broadcast %24 : vector<24x1xf32> to vector<24x16xf32>
    %26 = arith.subf %22, %25 : vector<24x16xf32>
    %27 = math.exp %26 : vector<24x16xf32>
    %cst_9 = arith.constant dense<0.000000e+00> : vector<24xf32>
    %28 = vector.multi_reduction <add>, %27, %cst_9 [1] : vector<24x16xf32> to vector<24xf32>
    %29 = vector.shape_cast %28 : vector<24xf32> to vector<24x1xf32>
    %30 = tpu.reciprocal %29 {approx = true} : vector<24x1xf32> -> vector<24x1xf32>
    %31 = vector.broadcast %30 : vector<24x1xf32> to vector<24x16xf32>
    %32 = arith.mulf %27, %31 : vector<24x16xf32>
    %33 = vector.shape_cast %32 : vector<24x16xf32> to vector<24x16x1xf32>
    %34 = vector.broadcast %33 : vector<24x16x1xf32> to vector<24x16x128xf32>
    %35 = arith.mulf %34, %17 : vector<24x16x128xf32>
    %cst_10 = arith.constant dense<0.000000e+00> : vector<24x128xf32>
    %36 = vector.multi_reduction <add>, %35, %cst_10 [1] : vector<24x16x128xf32> to vector<24x128xf32>
    %c0_11 = arith.constant 0 : index
    %c0_12 = arith.constant 0 : index
    %37 = vector.load %arg5[%c0_11, %c0_12] : memref<24x128xf32, #tpu.memory_space<vmem>>, vector<24x128xf32>
    tpu.vector_store %arg5[%c0_11, %c0_12], %36 {strides = array<i32>} : memref<24x128xf32, #tpu.memory_space<vmem>>, vector<24x128xf32>,
    return
  }
  func.func @transform_0(%arg0: i32) -> (i32, i32) {
    %c0_i32 = arith.constant 0 : i32
    %c0_i32_0 = arith.constant 0 : i32
    return %arg0, %c0_i32 : i32, i32
  }
  func.func @transform_1(%arg0: i32) -> (i32, i32) {
    %c0_i32 = arith.constant 0 : i32
    %c0_i32_0 = arith.constant 0 : i32
    %c0_i32_1 = arith.constant 0 : i32
    return %c0_i32, %c0_i32_0 : i32, i32
  }
  func.func @transform_2(%arg0: i32) -> (i32, i32) {
    %c0_i32 = arith.constant 0 : i32
    %c0_i32_0 = arith.constant 0 : i32
    %c0_i32_1 = arith.constant 0 : i32
    return %c0_i32, %c0_i32_0 : i32, i32
  }
  func.func @transform_3(%arg0: i32) -> (i32, i32) {
    %c0_i32 = arith.constant 0 : i32
    %c0_i32_0 = arith.constant 0 : i32
    %c0_i32_1 = arith.constant 0 : i32
    return %c0_i32, %c0_i32_0 : i32, i32
  }
  func.func @transform_4(%arg0: i32) -> (i32, i32) {
    %c0_i32 = arith.constant 0 : i32
    %c0_i32_0 = arith.constant 0 : i32
    return %arg0, %c0_i32 : i32, i32
  }
}

module attributes {stable_mosaic.version = 11 : i64} {
  func.func @_user_score_kernel(%arg0: i32, %arg1: memref<8x8x128xf32, #tpu.memory_space<vmem>>, %arg2: memref<4x8x128xf32, #tpu.memory_space<vmem>>, %arg3: memref<128x128xbf16, #tpu.memory_space<vmem>>, %arg4: memref<1x128xf32, #tpu.memory_space<vmem>>, %arg5: memref<1x128xf32, #tpu.memory_space<vmem>>, %arg6: memref<4x8xf32, #tpu.memory_space<vmem>>) attributes {dimension_semantics = [#tpu.dimension_semantics<parallel>], iteration_bounds = array<i64: 1>, scalar_prefetch = 0 : i64, scratch_operands = 0 : i64, tpu.core_type = #tpu.core_type<tc>, window_params = [{transform_indices = @transform_0, window_bounds = array<i64: 8, 8, 128>}, {transform_indices = @transform_1, window_bounds = array<i64: 4, 8, 128>}, {pipeline_mode = #tpu.pipeline_mode<synchronous>, transform_indices = @transform_2, window_bounds = array<i64: 128, 128>}, {pipeline_mode = #tpu.pipeline_mode<synchronous>, transform_indices = @transform_3, window_bounds = array<i64: 1, 128>}, {pipeline_mode = #tpu.pipeline_mode<synchronous>, transform_indices = @transform_4, window_bounds = array<i64: 1, 128>}, {transform_indices = @transform_5, window_bounds = array<i64: 4, 8>}]} {
    %c0 = arith.constant 0 : index
    %c0_0 = arith.constant 0 : index
    %c0_1 = arith.constant 0 : index
    %0 = vector.load %arg1[%c0, %c0_0, %c0_1] : memref<8x8x128xf32, #tpu.memory_space<vmem>>, vector<8x8x128xf32>
    %c0_2 = arith.constant 0 : index
    %c0_3 = arith.constant 0 : index
    %1 = vector.load %arg3[%c0_2, %c0_3] : memref<128x128xbf16, #tpu.memory_space<vmem>>, vector<128x128xbf16>
    %2 = vector.shape_cast %0 : vector<8x8x128xf32> to vector<64x128xf32>
    %3 = arith.truncf %2 : vector<64x128xf32> to vector<64x128xbf16>
    %cst = arith.constant dense<0.000000e+00> : vector<64x128xf32>
    %4 = tpu.matmul %3, %1, %cst {dimension_numbers = #tpu.dot_dimension_numbers<[1], [0], [0], [1], [0, 0, 1, 1], [], []>} : vector<64x128xbf16>, vector<128x128xbf16>, vector<64x128xf32> -> vector<64x128xf32>
    %c0_4 = arith.constant 0 : index
    %c0_5 = arith.constant 0 : index
    %5 = vector.load %arg4[%c0_4, %c0_5] : memref<1x128xf32, #tpu.memory_space<vmem>>, vector<1x128xf32>
    %6 = vector.broadcast %5 : vector<1x128xf32> to vector<64x128xf32>
    %7 = arith.addf %4, %6 : vector<64x128xf32>
    %8 = arith.truncf %7 : vector<64x128xf32> to vector<64x128xbf16>
    %9 = math.tanh %8 : vector<64x128xbf16>
    %10 = arith.extf %9 : vector<64x128xbf16> to vector<64x128xf32>
    %11 = vector.shape_cast %10 : vector<64x128xf32> to vector<8x8x128xf32>
    %c0_6 = arith.constant 0 : index
    %c0_7 = arith.constant 0 : index
    %12 = vector.load %arg5[%c0_6, %c0_7] : memref<1x128xf32, #tpu.memory_space<vmem>>, vector<1x128xf32>
    %13 = vector.shape_cast %12 : vector<1x128xf32> to vector<1x1x128xf32>
    %14 = vector.broadcast %13 : vector<1x1x128xf32> to vector<8x8x128xf32>
    %15 = arith.mulf %11, %14 : vector<8x8x128xf32>
    %cst_8 = arith.constant dense<0.000000e+00> : vector<8x8xf32>
    %16 = vector.multi_reduction <add>, %15, %cst_8 [2] : vector<8x8x128xf32> to vector<8x8xf32>
    %cst_9 = arith.constant dense<0xFF800000> : vector<8xf32>
    %17 = vector.multi_reduction <maximumf>, %16, %cst_9 [1] : vector<8x8xf32> to vector<8xf32>
    %18 = vector.shape_cast %17 : vector<8xf32> to vector<8x1xf32>
    %19 = vector.broadcast %18 : vector<8x1xf32> to vector<8x8xf32>
    %20 = arith.subf %16, %19 : vector<8x8xf32>
    %21 = math.exp %20 : vector<8x8xf32>
    %cst_10 = arith.constant dense<0.000000e+00> : vector<8xf32>
    %22 = vector.multi_reduction <add>, %21, %cst_10 [1] : vector<8x8xf32> to vector<8xf32>
    %23 = vector.shape_cast %22 : vector<8xf32> to vector<8x1xf32>
    %24 = tpu.reciprocal %23 {approx = true} : vector<8x1xf32> -> vector<8x1xf32>
    %25 = vector.broadcast %24 : vector<8x1xf32> to vector<8x8xf32>
    %26 = arith.mulf %21, %25 : vector<8x8xf32>
    %27 = vector.shape_cast %26 : vector<8x8xf32> to vector<8x8x1xf32>
    %28 = vector.broadcast %27 : vector<8x8x1xf32> to vector<8x8x128xf32>
    %29 = arith.mulf %28, %11 : vector<8x8x128xf32>
    %cst_11 = arith.constant dense<0.000000e+00> : vector<8x128xf32>
    %30 = vector.multi_reduction <add>, %29, %cst_11 [1] : vector<8x8x128xf32> to vector<8x128xf32>
    %c0_12 = arith.constant 0 : index
    %c0_13 = arith.constant 0 : index
    %c0_14 = arith.constant 0 : index
    %31 = vector.load %arg2[%c0_12, %c0_13, %c0_14] : memref<4x8x128xf32, #tpu.memory_space<vmem>>, vector<4x8x128xf32>
    %32 = vector.shape_cast %30 : vector<8x128xf32> to vector<1x8x128xf32>
    %33 = vector.broadcast %32 : vector<1x8x128xf32> to vector<4x8x128xf32>
    %34 = arith.mulf %31, %33 : vector<4x8x128xf32>
    %cst_15 = arith.constant dense<0.000000e+00> : vector<4x8xf32>
    %35 = vector.multi_reduction <add>, %34, %cst_15 [2] : vector<4x8x128xf32> to vector<4x8xf32>
    %c0_16 = arith.constant 0 : index
    %c0_17 = arith.constant 0 : index
    %36 = vector.load %arg6[%c0_16, %c0_17] : memref<4x8xf32, #tpu.memory_space<vmem>>, vector<4x8xf32>
    tpu.vector_store %arg6[%c0_16, %c0_17], %35 {strides = array<i32>} : memref<4x8xf32, #tpu.memory_space<vmem>>, vector<4x8xf32>,
    return
  }
  func.func @transform_0(%arg0: i32) -> (i32, i32, i32) {
    %c0_i32 = arith.constant 0 : i32
    %c0_i32_0 = arith.constant 0 : i32
    %c0_i32_1 = arith.constant 0 : i32
    return %arg0, %c0_i32, %c0_i32_0 : i32, i32, i32
  }
  func.func @transform_1(%arg0: i32) -> (i32, i32, i32) {
    %c0_i32 = arith.constant 0 : i32
    %c0_i32_0 = arith.constant 0 : i32
    %c0_i32_1 = arith.constant 0 : i32
    return %c0_i32, %arg0, %c0_i32_0 : i32, i32, i32
  }
  func.func @transform_2(%arg0: i32) -> (i32, i32) {
    %c0_i32 = arith.constant 0 : i32
    %c0_i32_0 = arith.constant 0 : i32
    %c0_i32_1 = arith.constant 0 : i32
    return %c0_i32, %c0_i32_0 : i32, i32
  }
  func.func @transform_3(%arg0: i32) -> (i32, i32) {
    %c0_i32 = arith.constant 0 : i32
    %c0_i32_0 = arith.constant 0 : i32
    %c0_i32_1 = arith.constant 0 : i32
    return %c0_i32, %c0_i32_0 : i32, i32
  }
  func.func @transform_4(%arg0: i32) -> (i32, i32) {
    %c0_i32 = arith.constant 0 : i32
    %c0_i32_0 = arith.constant 0 : i32
    %c0_i32_1 = arith.constant 0 : i32
    return %c0_i32, %c0_i32_0 : i32, i32
  }
  func.func @transform_5(%arg0: i32) -> (i32, i32) {
    %c0_i32 = arith.constant 0 : i32
    %c0_i32_0 = arith.constant 0 : i32
    return %c0_i32, %arg0 : i32, i32
  }
}

</mosaic_0001>

<llo_original>
// kernel: _lambda_.3
$region0: #{_lambda_.3}
  #allocation0 [shape = 'u32[]', space=smem, size = 0x4, offset = 0x4, fixed_abs, tag = 'smem constant byte address 0x4 - core index']
  #allocation1 [shape = 'u32[144,128]{1,0:T(1,128)}', space=vmem, size = 0x12000, scoped, tag = 'internal scratch']
  %s0 = inlined_call_operand.vmem [shape: f32[8,8,128], index: 0, kind: input, shape index: {}]
  %s1 = inlined_call_operand.vmem [shape: f32[4,8,128], index: 1, kind: input, shape index: {}]
  %s2 = inlined_call_operand.vmem [shape: bf16[128,128], index: 2, kind: input, shape index: {}]
  %s3 = inlined_call_operand.vmem [shape: f32[1,128], index: 3, kind: input, shape index: {}]
  %s4 = inlined_call_operand.vmem [shape: f32[1,128], index: 4, kind: input, shape index: {}]
  %s5 = inlined_call_operand.vmem [shape: f32[4,8], index: 5, kind: output, shape index: {}]
  %s6 = sld [smem:[#allocation0]]
  $region30: #{_lambda_.3} parent=0
    _
  %s8 = ssub.s32 1, %s6
  %s9 = scalar_select 0, %s8, %s6
  // Predicated region
  $region2: #{_lambda_.3} parent=0 // pred_check
    _
  $region3: #{_lambda_.3} parent=0 // pred_check_branch
    %11 = sbr.rel (0) target = $region5
  $region4: #{_lambda_.3} parent=0 // pred_region
    _
  $region5: #{_lambda_.3} parent=0 // pred_fallthru
    _
  // Predicated region
  $region6: #{_lambda_.3} parent=0 // pred_check
    _
  $region7: #{_lambda_.3} parent=0 // pred_check_branch
    %13 = sbr.rel (0) target = $region9
  $region8: #{_lambda_.3} parent=0 // pred_region
    _
  $region9: #{_lambda_.3} parent=0 // pred_fallthru
    _
  // Predicated region
  $region10: #{_lambda_.3} parent=0 // pred_check
    _
  $region11: #{_lambda_.3} parent=0 // pred_check_branch
    %15 = sbr.rel (0) target = $region13
  $region12: #{_lambda_.3} parent=0 // pred_region
    _
  $region13: #{_lambda_.3} parent=0 // pred_fallthru
    _
  // Predicated region
  $region14: #{_lambda_.3} parent=0 // pred_check
    _
  $region15: #{_lambda_.3} parent=0 // pred_check_branch
    %17 = sbr.rel (0) target = $region17
  $region16: #{_lambda_.3} parent=0 // pred_region
    _
  $region17: #{_lambda_.3} parent=0 // pred_fallthru
    _
  // Predicated region
  $region18: #{_lambda_.3} parent=0 // pred_check
    _
  $region19: #{_lambda_.3} parent=0 // pred_check_branch
    %19 = sbr.rel (0) target = $region21
  $region20: #{_lambda_.3} parent=0 // pred_region
    _
  $region21: #{_lambda_.3} parent=0 // pred_fallthru
    _
  %v21 = vld [vmem:[%s0] sm:$0xff]
  %v22 = vld [vmem:[%s0 + $0x8] sm:$0xff]
  %v23 = vld [vmem:[%s0 + $0x10] sm:$0xff]
  %v24 = vld [vmem:[%s0 + $0x18] sm:$0xff]
  %v25 = vld [vmem:[%s0 + $0x20] sm:$0xff]
  %v26 = vld [vmem:[%s0 + $0x28] sm:$0xff]
  %v27 = vld [vmem:[%s0 + $0x30] sm:$0xff]
  %v28 = vld [vmem:[%s0 + $0x38] sm:$0xff]
  %v29 = vld [vmem:[%s2] sm:$0xf]
  %v30 = vld [vmem:[%s2 + $0x4] sm:$0xf]
  %v31 = vld [vmem:[%s2 + $0x8] sm:$0xf]
  %v32 = vld [vmem:[%s2 + $0xc] sm:$0xf]
  %v33 = vld [vmem:[%s2 + $0x10] sm:$0xf]
  %v34 = vld [vmem:[%s2 + $0x14] sm:$0xf]
  %v35 = vld [vmem:[%s2 + $0x18] sm:$0xf]
  %v36 = vld [vmem:[%s2 + $0x1c] sm:$0xf]
  %v37 = vld [vmem:[%s2 + $0x20] sm:$0xf]
  %v38 = vld [vmem:[%s2 + $0x24] sm:$0xf]
  %v39 = vld [vmem:[%s2 + $0x28] sm:$0xf]
  %v40 = vld [vmem:[%s2 + $0x2c] sm:$0xf]
  %v41 = vld [vmem:[%s2 + $0x30] sm:$0xf]
  %v42 = vld [vmem:[%s2 + $0x34] sm:$0xf]
  %v43 = vld [vmem:[%s2 + $0x38] sm:$0xf]
  %v44 = vld [vmem:[%s2 + $0x3c] sm:$0xf]
  %v45 = vpack.c.bf16 %v22, %v21
  %v46 = vpack.c.bf16 %v24, %v23
  %v47 = vpack.c.bf16 %v26, %v25
  %v48 = vpack.c.bf16 %v28, %v27
  %v49 = vld [vmem:[%s3] sm:$0x1]
  %v51 = vlaneseq
  %v52 = vshrl.u32 %v51, 7
  %v53 = vsub.s32 0, %v52
  %v54 = vrot.slane %v49, %v53
  %v72 = vunpack.c.l.b16 %v29
  %v73 = vunpack.c.l.b16 %v30
  %v74 = vunpack.c.l.b16 %v31
  %v75 = vunpack.c.l.b16 %v32
  %v76 = vunpack.c.l.b16 %v33
  %v77 = vunpack.c.l.b16 %v34
  %v78 = vunpack.c.l.b16 %v35
  %v79 = vunpack.c.l.b16 %v36
  %v80 = vunpack.c.l.b16 %v37
  %v81 = vunpack.c.l.b16 %v38
  %v82 = vunpack.c.l.b16 %v39
  %v83 = vunpack.c.l.b16 %v40
  %v84 = vunpack.c.l.b16 %v41
  %v85 = vunpack.c.l.b16 %v42
  %v86 = vunpack.c.l.b16 %v43
  %v87 = vunpack.c.l.b16 %v44
  %v88 = vpack.c.b16 %v73, %v72
  %v89 = vpack.c.b16 %v75, %v74
  %v90 = vpack.c.b16 %v77, %v76
  %v91 = vpack.c.b16 %v79, %v78
  %v92 = vpack.c.b16 %v81, %v80
  %v93 = vpack.c.b16 %v83, %v82
  %v94 = vpack.c.b16 %v85, %v84
  %v95 = vpack.c.b16 %v87, %v86
  %104 = vmatprep.subr.bf16.mxu0 0
  %105 = vmatpush1.bf16.msra.mxu0 %v88
  %106 = vmatprep.subr.bf16.mxu0 0
  %107 = vmatpush1.bf16.msra.mxu0 %v89
  %108 = vmatprep.subr.bf16.mxu0 0
  %109 = vmatpush1.bf16.msra.mxu0 %v90
  %110 = vmatprep.subr.bf16.mxu0 0
  %111 = vmatpush1.bf16.msra.mxu0 %v91
  %112 = vmatprep.subr.bf16.mxu0 0
  %113 = vmatpush1.bf16.msra.mxu0 %v92
  %114 = vmatprep.subr.bf16.mxu0 0
  %115 = vmatpush1.bf16.msra.mxu0 %v93
  %116 = vmatprep.subr.bf16.mxu0 0
  %117 = vmatpush1.bf16.msra.mxu0 %v94
  %118 = vmatprep.subr.bf16.mxu0 0
  %119 = vmatpush1.bf16.msra.mxu0 %v95
  %120 = vmatprep.subr.bf16.mxu0 0
  %121 = vmatpush1.bf16.msra.mxu0 0
  %122 = vmatprep.subr.bf16.mxu0 0
  %123 = vmatpush1.bf16.msra.mxu0 0
  %124 = vmatprep.subr.bf16.mxu0 0
  %125 = vmatpush1.bf16.msra.mxu0 0
  %126 = vmatprep.subr.bf16.mxu0 0
  %127 = vmatpush1.bf16.msra.mxu0 0
  %128 = vmatprep.subr.bf16.mxu0 0
  %129 = vmatpush1.bf16.msra.mxu0 0
  %130 = vmatprep.subr.bf16.mxu0 0
  %131 = vmatpush1.bf16.msra.mxu0 0
  %132 = vmatprep.subr.bf16.mxu0 0
  %133 = vmatpush1.bf16.msra.mxu0 0
  %134 = vmatprep.subr.bf16.mxu0 0
  %135 = vmatpush1.bf16.msra.mxu0 0
  %136 = vmatprep.mubr.bf16.mxu0 0
  %137 = vmatmul.mubr.bf16.gmra.mrb[0].mxu0 %v45
  %v138 = vpop.f32.mrb[0].mxu0
  %v139 = vadd.f32 %v54, %v138
  %v140 = vpop.f32.mrb[0].mxu0
  %v141 = vpop.f32.mrb[0].mxu0
  %v142 = vadd.f32 %v54, %v141
  %v143 = vpop.f32.mrb[0].mxu0
  %144 = vmatprep.mubr.bf16.mxu0 0
  %145 = vmatmul.mubr.bf16.gmra.mrb[0].mxu0 %v46
  %v146 = vpop.f32.mrb[0].mxu0
  %v147 = vadd.f32 %v54, %v146
  %v148 = vpop.f32.mrb[0].mxu0
  %v149 = vpop.f32.mrb[0].mxu0
  %v150 = vadd.f32 %v54, %v149
  %v151 = vpop.f32.mrb[0].mxu0
  %152 = vmatprep.mubr.bf16.mxu0 0
  %153 = vmatmul.mubr.bf16.gmra.mrb[0].mxu0 %v47
  %v154 = vpop.f32.mrb[0].mxu0
  %v155 = vadd.f32 %v54, %v154
  %v156 = vpop.f32.mrb[0].mxu0
  %v157 = vpop.f32.mrb[0].mxu0
  %v158 = vadd.f32 %v54, %v157
  %v159 = vpop.f32.mrb[0].mxu0
  %160 = vmatprep.mubr.bf16.mxu0 0
  %161 = vmatmul.mubr.bf16.gmra.mrb[0].mxu0 %v48
  %v162 = vpop.f32.mrb[0].mxu0
  %v163 = vadd.f32 %v54, %v162
  %v164 = vpop.f32.mrb[0].mxu0
  %v165 = vpop.f32.mrb[0].mxu0
  %v166 = vadd.f32 %v54, %v165
  %v167 = vpop.f32.mrb[0].mxu0
  %168 = vdwg.mxu0
  %v169 = vpack.c.bf16 %v142, %v139
  %v170 = vpack.c.bf16 %v150, %v147
  %v171 = vpack.c.bf16 %v158, %v155
  %v172 = vpack.c.bf16 %v166, %v163
  %v173 = vtanh.bf16.pop %v169
  %v174 = vtanh.bf16.pop %v170
  %v175 = vtanh.bf16.pop %v171
  %v176 = vtanh.bf16.pop %v172
  %v177 = vunpack.c.l.bf16 %v173
  %v178 = vunpack.c.h.bf16 %v173
  %v179 = vunpack.c.l.bf16 %v174
  %v180 = vunpack.c.h.bf16 %v174
  %v181 = vunpack.c.l.bf16 %v175
  %v182 = vunpack.c.h.bf16 %v175
  %v183 = vunpack.c.l.bf16 %v176
  %v184 = vunpack.c.h.bf16 %v176
  %v185 = vld [vmem:[%s4] sm:$0x1]
  %v187 = vlaneseq
  %v188 = vshrl.u32 %v187, 7
  %v189 = vsub.s32 0, %v188
  %v190 = vrot.slane %v185, %v189
  %v192 = vmul.f32 %v177, %v190
  %v193 = vmul.f32 %v178, %v190
  %v194 = vmul.f32 %v179, %v190
  %v195 = vmul.f32 %v180, %v190
  %v196 = vmul.f32 %v181, %v190
  %v197 = vmul.f32 %v182, %v190
  %v198 = vmul.f32 %v183, %v190
  %v199 = vmul.f32 %v184, %v190
  %200 = vadd.xlane.f32.xlu0 %v192
  %v201 = vpop.xlane.xlu0 %200
  %202 = vadd.xlane.f32.xlu0 %v193
  %v203 = vpop.xlane.xlu0 %202
  %204 = vadd.xlane.f32.xlu0 %v194
  %v205 = vpop.xlane.xlu0 %204
  %206 = vadd.xlane.f32.xlu0 %v195
  %v207 = vpop.xlane.xlu0 %206
  %208 = vadd.xlane.f32.xlu0 %v196
  %v209 = vpop.xlane.xlu0 %208
  %210 = vadd.xlane.f32.xlu0 %v197
  %v211 = vpop.xlane.xlu0 %210
  %212 = vadd.xlane.f32.xlu0 %v198
  %v213 = vpop.xlane.xlu0 %212
  %214 = vadd.xlane.f32.xlu0 %v199
  %v215 = vpop.xlane.xlu0 %214
  %v224 = vlaneseq
  %v225 = vand.u32 %v224, 127
  %v226 = vlaneseq
  %v227 = vshrl.u32 %v226, 7
  %v228 = vsub.s32 %v225, %v227
  %v229 = vrot.slane %v201, %v228
  %v230 = vlaneseq
  %v231 = vshrl.u32 %v230, 7
  %v232 = vsub.s32 %v225, %v231
  %v233 = vrot.slane %v203, %v232
  %v234 = vlaneseq
  %v235 = vshrl.u32 %v234, 7
  %v236 = vsub.s32 %v225, %v235
  %v237 = vrot.slane %v205, %v236
  %v238 = vlaneseq
  %v239 = vshrl.u32 %v238, 7
  %v240 = vsub.s32 %v225, %v239
  %v241 = vrot.slane %v207, %v240
  %v242 = vlaneseq
  %v243 = vshrl.u32 %v242, 7
  %v244 = vsub.s32 %v225, %v243
  %v245 = vrot.slane %v209, %v244
  %v246 = vlaneseq
  %v247 = vshrl.u32 %v246, 7
  %v248 = vsub.s32 %v225, %v247
  %v249 = vrot.slane %v211, %v248
  %v250 = vlaneseq
  %v251 = vshrl.u32 %v250, 7
  %v252 = vsub.s32 %v225, %v251
  %v253 = vrot.slane %v213, %v252
  %v254 = vlaneseq
  %v255 = vshrl.u32 %v254, 7
  %v256 = vsub.s32 %v225, %v255
  %v257 = vrot.slane %v215, %v256
  %vm258 = vcmask 1041409
  %v259 = vsel %vm258, %v233, %v229
  %vm260 = vcmask 1042434
  %v261 = vsel %vm260, %v237, %v259
  %vm262 = vcmask 1043459
  %v263 = vsel %vm262, %v241, %v261
  %vm264 = vcmask 1044484
  %v265 = vsel %vm264, %v245, %v263
  %vm266 = vcmask 1045509
  %v267 = vsel %vm266, %v249, %v265
  %vm268 = vcmask 1046534
  %v269 = vsel %vm268, %v253, %v267
  %vm270 = vcmask 1047559
  %v271 = vsel %vm270, %v257, %v269
  %vm273 = vcmask 64512
  %v274 = vsel %vm273, %v271, -inf
  %275 = vmax.xlane.f32.xlu0 %v274
  %v276 = vpop.xlane.xlu0 %275
  %v278 = vlaneseq
  %v279 = vshrl.u32 %v278, 7
  %v280 = vsub.s32 0, %v279
  %v281 = vrot.slane %v276, %v280
  %v282 = vlaneseq
  %v283 = vshrl.u32 %v282, 7
  %v284 = vsub.s32 1, %v283
  %v285 = vrot.slane %v276, %v284
  %v286 = vlaneseq
  %v287 = vshrl.u32 %v286, 7
  %v288 = vsub.s32 2, %v287
  %v289 = vrot.slane %v276, %v288
  %v290 = vlaneseq
  %v291 = vshrl.u32 %v290, 7
  %v292 = vsub.s32 3, %v291
  %v293 = vrot.slane %v276, %v292
  %v294 = vlaneseq
  %v295 = vshrl.u32 %v294, 7
  %v296 = vsub.s32 4, %v295
  %v297 = vrot.slane %v276, %v296
  %v298 = vlaneseq
  %v299 = vshrl.u32 %v298, 7
  %v300 = vsub.s32 5, %v299
  %v301 = vrot.slane %v276, %v300
  %v302 = vlaneseq
  %v303 = vshrl.u32 %v302, 7
  %v304 = vsub.s32 6, %v303
  %v305 = vrot.slane %v276, %v304
  %v306 = vlaneseq
  %v307 = vshrl.u32 %v306, 7
  %v308 = vsub.s32 7, %v307
  %v309 = vrot.slane %v276, %v308
  %v318 = vsub.f32 %v201, %v281
  %v319 = vsub.f32 %v203, %v285
  %v320 = vsub.f32 %v205, %v289
  %v321 = vsub.f32 %v207, %v293
  %v322 = vsub.f32 %v209, %v297
  %v323 = vsub.f32 %v211, %v301
  %v324 = vsub.f32 %v213, %v305
  %v325 = vsub.f32 %v215, %v309
  %v326 = vmul.f32 %v318, 1.442695
  %v327 = vpow.pop %v326
  %v328 = vmul.f32 %v319, 1.442695
  %v329 = vpow.pop %v328
  %v330 = vmul.f32 %v320, 1.442695
  %v331 = vpow.pop %v330
  %v332 = vmul.f32 %v321, 1.442695
  %v333 = vpow.pop %v332
  %v334 = vmul.f32 %v322, 1.442695
  %v335 = vpow.pop %v334
  %v336 = vmul.f32 %v323, 1.442695
  %v337 = vpow.pop %v336
  %v338 = vmul.f32 %v324, 1.442695
  %v339 = vpow.pop %v338
  %v340 = vmul.f32 %v325, 1.442695
  %v341 = vpow.pop %v340
  %350 = vset.pattern.permute.xlu0 0
  %351 = vperm.xlu0 %350, %v327
  %v352 = vpop.permute.xlu0 %351
  %353 = vset.pattern.permute.xlu0 0
  %354 = vperm.xlu0 %353, %v329
  %v355 = vpop.permute.xlu0 %354
  %356 = vset.pattern.permute.xlu0 0
  %357 = vperm.xlu0 %356, %v331
  %v358 = vpop.permute.xlu0 %357
  %359 = vset.pattern.permute.xlu0 0
  %360 = vperm.xlu0 %359, %v333
  %v361 = vpop.permute.xlu0 %360
  %362 = vset.pattern.permute.xlu0 0
  %363 = vperm.xlu0 %362, %v335
  %v364 = vpop.permute.xlu0 %363
  %365 = vset.pattern.permute.xlu0 0
  %366 = vperm.xlu0 %365, %v337
  %v367 = vpop.permute.xlu0 %366
  %368 = vset.pattern.permute.xlu0 0
  %369 = vperm.xlu0 %368, %v339
  %v370 = vpop.permute.xlu0 %369
  %371 = vset.pattern.permute.xlu0 0
  %372 = vperm.xlu0 %371, %v341
  %v373 = vpop.permute.xlu0 %372
  %v374 = vlaneseq
  %v375 = vshrl.u32 %v374, 7
  %v376 = vsub.s32 %v225, %v375
  %v377 = vrot.slane %v352, %v376
  %v378 = vlaneseq
  %v379 = vshrl.u32 %v378, 7
  %v380 = vsub.s32 %v225, %v379
  %v381 = vrot.slane %v355, %v380
  %v382 = vlaneseq
  %v383 = vshrl.u32 %v382, 7
  %v384 = vsub.s32 %v225, %v383
  %v385 = vrot.slane %v358, %v384
  %v386 = vlaneseq
  %v387 = vshrl.u32 %v386, 7
  %v388 = vsub.s32 %v225, %v387
  %v389 = vrot.slane %v361, %v388
  %v390 = vlaneseq
  %v391 = vshrl.u32 %v390, 7
  %v392 = vsub.s32 %v225, %v391
  %v393 = vrot.slane %v364, %v392
  %v394 = vlaneseq
  %v395 = vshrl.u32 %v394, 7
  %v396 = vsub.s32 %v225, %v395
  %v397 = vrot.slane %v367, %v396
  %v398 = vlaneseq
  %v399 = vshrl.u32 %v398, 7
  %v400 = vsub.s32 %v225, %v399
  %v401 = vrot.slane %v370, %v400
  %v402 = vlaneseq
  %v403 = vshrl.u32 %v402, 7
  %v404 = vsub.s32 %v225, %v403
  %v405 = vrot.slane %v373, %v404
  %v406 = vsel %vm258, %v381, %v377
  %v407 = vsel %vm260, %v385, %v406
  %v408 = vsel %vm262, %v389, %v407
  %v409 = vsel %vm264, %v393, %v408
  %v410 = vsel %vm266, %v397, %v409
  %v411 = vsel %vm268, %v401, %v410
  %v412 = vsel %vm270, %v405, %v411
  %v414 = vsel %vm273, %v412, 0.0
  %415 = vadd.xlane.f32.xlu0 %v414
  %v416 = vpop.xlane.xlu0 %415
  %v417 = vrcp.pop %v416
  %v419 = vlaneseq
  %v420 = vshrl.u32 %v419, 7
  %v421 = vsub.s32 0, %v420
  %v422 = vrot.slane %v417, %v421
  %v423 = vlaneseq
  %v424 = vshrl.u32 %v423, 7
  %v425 = vsub.s32 1, %v424
  %v426 = vrot.slane %v417, %v425
  %v427 = vlaneseq
  %v428 = vshrl.u32 %v427, 7
  %v429 = vsub.s32 2, %v428
  %v430 = vrot.slane %v417, %v429
  %v431 = vlaneseq
  %v432 = vshrl.u32 %v431, 7
  %v433 = vsub.s32 3, %v432
  %v434 = vrot.slane %v417, %v433
  %v435 = vlaneseq
  %v436 = vshrl.u32 %v435, 7
  %v437 = vsub.s32 4, %v436
  %v438 = vrot.slane %v417, %v437
  %v439 = vlaneseq
  %v440 = vshrl.u32 %v439, 7
  %v441 = vsub.s32 5, %v440
  %v442 = vrot.slane %v417, %v441
  %v443 = vlaneseq
  %v444 = vshrl.u32 %v443, 7
  %v445 = vsub.s32 6, %v444
  %v446 = vrot.slane %v417, %v445
  %v447 = vlaneseq
  %v448 = vshrl.u32 %v447, 7
  %v449 = vsub.s32 7, %v448
  %v450 = vrot.slane %v417, %v449
  %v459 = vmul.f32 %v327, %v422
  %v460 = vmul.f32 %v329, %v426
  %v461 = vmul.f32 %v331, %v430
  %v462 = vmul.f32 %v333, %v434
  %v463 = vmul.f32 %v335, %v438
  %v464 = vmul.f32 %v337, %v442
  %v465 = vmul.f32 %v339, %v446
  %v466 = vmul.f32 %v341, %v450
  %468 = vset.pattern.permute.xlu0 0
  %469 = vperm.xlu0 %468, %v459
  %v470 = vpop.permute.xlu0 %469
  %473 = vset.pattern.permute.xlu0 0
  %474 = vperm.xlu0 %473, %v460
  %v475 = vpop.permute.xlu0 %474
  %478 = vset.pattern.permute.xlu0 0
  %479 = vperm.xlu0 %478, %v461
  %v480 = vpop.permute.xlu0 %479
  %483 = vset.pattern.permute.xlu0 0
  %484 = vperm.xlu0 %483, %v462
  %v485 = vpop.permute.xlu0 %484
  %488 = vset.pattern.permute.xlu0 0
  %489 = vperm.xlu0 %488, %v463
  %v490 = vpop.permute.xlu0 %489
  %493 = vset.pattern.permute.xlu0 0
  %494 = vperm.xlu0 %493, %v464
  %v495 = vpop.permute.xlu0 %494
  %498 = vset.pattern.permute.xlu0 0
  %499 = vperm.xlu0 %498, %v465
  %v500 = vpop.permute.xlu0 %499
  %503 = vset.pattern.permute.xlu0 0
  %504 = vperm.xlu0 %503, %v466
  %v505 = vpop.permute.xlu0 %504
  %v507 = vmul.f32 %v470, %v177
  %v508 = vmul.f32 %v475, %v178
  %v509 = vmul.f32 %v480, %v179
  %v510 = vmul.f32 %v485, %v180
  %v511 = vmul.f32 %v490, %v181
  %v512 = vmul.f32 %v495, %v182
  %v513 = vmul.f32 %v500, %v183
  %v514 = vmul.f32 %v505, %v184
  %v515 = vrot.slane %v507, 4
  %v516 = vadd.f32 %v507, %v515
  %v517 = vrot.slane %v516, 2
  %v518 = vadd.f32 %v516, %v517
  %v519 = vrot.slane %v518, 1
  %v520 = vadd.f32 %v518, %v519
  %v521 = vrot.slane %v508, 4
  %v522 = vadd.f32 %v508, %v521
  %v523 = vrot.slane %v522, 2
  %v524 = vadd.f32 %v522, %v523
  %v525 = vrot.slane %v524, 1
  %v526 = vadd.f32 %v524, %v525
  %v527 = vrot.slane %v509, 4
  %v528 = vadd.f32 %v509, %v527
  %v529 = vrot.slane %v528, 2
  %v530 = vadd.f32 %v528, %v529
  %v531 = vrot.slane %v530, 1
  %v532 = vadd.f32 %v530, %v531
  %v533 = vrot.slane %v510, 4
  %v534 = vadd.f32 %v510, %v533
  %v535 = vrot.slane %v534, 2
  %v536 = vadd.f32 %v534, %v535
  %v537 = vrot.slane %v536, 1
  %v538 = vadd.f32 %v536, %v537
  %v539 = vrot.slane %v511, 4
  %v540 = vadd.f32 %v511, %v539
  %v541 = vrot.slane %v540, 2
  %v542 = vadd.f32 %v540, %v541
  %v543 = vrot.slane %v542, 1
  %v544 = vadd.f32 %v542, %v543
  %v545 = vrot.slane %v512, 4
  %v546 = vadd.f32 %v512, %v545
  %v547 = vrot.slane %v546, 2
  %v548 = vadd.f32 %v546, %v547
  %v549 = vrot.slane %v548, 1
  %v550 = vadd.f32 %v548, %v549
  %v551 = vrot.slane %v513, 4
  %v552 = vadd.f32 %v513, %v551
  %v553 = vrot.slane %v552, 2
  %v554 = vadd.f32 %v552, %v553
  %v555 = vrot.slane %v554, 1
  %v556 = vadd.f32 %v554, %v555
  %v557 = vrot.slane %v514, 4
  %v558 = vadd.f32 %v514, %v557
  %v559 = vrot.slane %v558, 2
  %v560 = vadd.f32 %v558, %v559
  %v561 = vrot.slane %v560, 1
  %v562 = vadd.f32 %v560, %v561
  %v563 = vld [vmem:[%s1] sm:$0xff]
  %v564 = vld [vmem:[%s1 + $0x8] sm:$0xff]
  %v565 = vld [vmem:[%s1 + $0x10] sm:$0xff]
  %v566 = vld [vmem:[%s1 + $0x18] sm:$0xff]
  %v575 = vsel %vm258, %v526, %v520
  %v576 = vsel %vm260, %v532, %v575
  %v577 = vsel %vm262, %v538, %v576
  %v578 = vsel %vm264, %v544, %v577
  %v579 = vsel %vm266, %v550, %v578
  %v580 = vsel %vm268, %v556, %v579
  %v581 = vsel %vm270, %v562, %v580
  %v583 = vmul.f32 %v563, %v581
  %v584 = vmul.f32 %v564, %v581
  %v585 = vmul.f32 %v565, %v581
  %v586 = vmul.f32 %v566, %v581
  %587 = vadd.xlane.f32.xlu0 %v583
  %v588 = vpop.xlane.xlu0 %587
  %589 = vadd.xlane.f32.xlu0 %v584
  %v590 = vpop.xlane.xlu0 %589
  %591 = vadd.xlane.f32.xlu0 %v585
  %v592 = vpop.xlane.xlu0 %591
  %593 = vadd.xlane.f32.xlu0 %v586
  %v594 = vpop.xlane.xlu0 %593
  %v599 = vlaneseq
  %v600 = vshrl.u32 %v599, 7
  %v601 = vsub.s32 %v225, %v600
  %v602 = vrot.slane %v588, %v601
  %v603 = vlaneseq
  %v604 = vshrl.u32 %v603, 7
  %v605 = vsub.s32 %v225, %v604
  %v606 = vrot.slane %v590, %v605
  %v607 = vlaneseq
  %v608 = vshrl.u32 %v607, 7
  %v609 = vsub.s32 %v225, %v608
  %v610 = vrot.slane %v592, %v609
  %v611 = vlaneseq
  %v612 = vshrl.u32 %v611, 7
  %v613 = vsub.s32 %v225, %v612
  %v614 = vrot.slane %v594, %v613
  %v615 = vsel %vm258, %v606, %v602
  %v616 = vsel %vm260, %v610, %v615
  %v617 = vsel %vm262, %v614, %v616
  %vm619 = vcmask 60416
  %620 = vst.msk [vmem:[%s5] sm:$0xf] %vm619, %v617
  // Predicated region
  $region22: #{_lambda_.3} parent=0 // pred_check
    _
  $region23: #{_lambda_.3} parent=0 // pred_check_branch
    %622 = sbr.rel (0) target = $region25
  $region24: #{_lambda_.3} parent=0 // pred_region
    _
  $region25: #{_lambda_.3} parent=0 // pred_fallthru
    _
  // Predicated region
  $region26: #{_lambda_.3} parent=0 // pred_check
    _
  $region27: #{_lambda_.3} parent=0 // pred_check_branch
    %624 = sbr.rel (0) target = $region29
  $region28: #{_lambda_.3} parent=0 // pred_region
    _
  $region29: #{_lambda_.3} parent=0 // pred_fallthru
    _

// kernel: _lambda_.2
$region0: #{_lambda_.2}
  #allocation0 [shape = 'u32[]', space=smem, size = 0x4, offset = 0x4, fixed_abs, tag = 'smem constant byte address 0x4 - core index']
  #allocation1 [shape = 'u32[144,128]{1,0:T(1,128)}', space=vmem, size = 0x12000, scoped, tag = 'internal scratch']
  %s0 = inlined_call_operand.vmem [shape: s32[24,16], index: 0, kind: input, shape index: {}]
  %s1 = inlined_call_operand.vmem [shape: bf16[128,128], index: 1, kind: input, shape index: {}]
  %s2 = inlined_call_operand.vmem [shape: f32[1,128], index: 2, kind: input, shape index: {}]
  %s3 = inlined_call_operand.vmem [shape: f32[1,128], index: 3, kind: input, shape index: {}]
  %s4 = inlined_call_operand.vmem [shape: f32[24,128], index: 4, kind: output, shape index: {}]
  %s5 = sld [smem:[#allocation0]]
  $region26: #{_lambda_.2} parent=0
    _
  %s7 = ssub.s32 1, %s5
  %s8 = scalar_select 0, %s7, %s5
  // Predicated region
  $region2: #{_lambda_.2} parent=0 // pred_check
    _
  $region3: #{_lambda_.2} parent=0 // pred_check_branch
    %10 = sbr.rel (0) target = $region5
  $region4: #{_lambda_.2} parent=0 // pred_region
    _
  $region5: #{_lambda_.2} parent=0 // pred_fallthru
    _
  // Predicated region
  $region6: #{_lambda_.2} parent=0 // pred_check
    _
  $region7: #{_lambda_.2} parent=0 // pred_check_branch
    %12 = sbr.rel (0) target = $region9
  $region8: #{_lambda_.2} parent=0 // pred_region
    _
  $region9: #{_lambda_.2} parent=0 // pred_fallthru
    _
  // Predicated region
  $region10: #{_lambda_.2} parent=0 // pred_check
    _
  $region11: #{_lambda_.2} parent=0 // pred_check_branch
    %14 = sbr.rel (0) target = $region13
  $region12: #{_lambda_.2} parent=0 // pred_region
    _
  $region13: #{_lambda_.2} parent=0 // pred_fallthru
    _
  // Predicated region
  $region14: #{_lambda_.2} parent=0 // pred_check
    _
  $region15: #{_lambda_.2} parent=0 // pred_check_branch
    %16 = sbr.rel (0) target = $region17
  $region16: #{_lambda_.2} parent=0 // pred_region
    _
  $region17: #{_lambda_.2} parent=0 // pred_fallthru
    _
  %v18 = vld [vmem:[%s0] sm:$0xff]
  %v19 = vld [vmem:[%s0 + $0x8] sm:$0xff]
  %v20 = vld [vmem:[%s0 + $0x10] sm:$0xff]
  %v21 = vld [vmem:[%s1] sm:$0xf]
  %v22 = vld [vmem:[%s1 + $0x4] sm:$0xf]
  %v23 = vld [vmem:[%s1 + $0x8] sm:$0xf]
  %v24 = vld [vmem:[%s1 + $0xc] sm:$0xf]
  %v25 = vld [vmem:[%s1 + $0x10] sm:$0xf]
  %v26 = vld [vmem:[%s1 + $0x14] sm:$0xf]
  %v27 = vld [vmem:[%s1 + $0x18] sm:$0xf]
  %v28 = vld [vmem:[%s1 + $0x1c] sm:$0xf]
  %v29 = vld [vmem:[%s1 + $0x20] sm:$0xf]
  %v30 = vld [vmem:[%s1 + $0x24] sm:$0xf]
  %v31 = vld [vmem:[%s1 + $0x28] sm:$0xf]
  %v32 = vld [vmem:[%s1 + $0x2c] sm:$0xf]
  %v33 = vld [vmem:[%s1 + $0x30] sm:$0xf]
  %v34 = vld [vmem:[%s1 + $0x34] sm:$0xf]
  %v35 = vld [vmem:[%s1 + $0x38] sm:$0xf]
  %v36 = vld [vmem:[%s1 + $0x3c] sm:$0xf]
  %v37 = vlaneseq
  %v38 = vand.u32 %v37, 127
  %v39 = vlaneseq
  %v40 = vshrl.u32 %v39, 7
  %v41 = vsub.s32 0, %v40
  %v42 = vrot.slane %v18, %v41
  %44 = vbcast.lane.b32.xlu0 %v42, 256
  %v45 = vpop.permute.xlu0 %44
  %s47 = sor.u32 256, 8
  %48 = vbcast.lane.b32.xlu0 %v42, %s47
  %v49 = vpop.permute.xlu0 %48
  %v50 = vlaneseq
  %v51 = vshrl.u32 %v50, 7
  %v52 = vsub.s32 1, %v51
  %v53 = vrot.slane %v18, %v52
  %55 = vbcast.lane.b32.xlu0 %v53, 256
  %v56 = vpop.permute.xlu0 %55
  %s58 = sor.u32 256, 8
  %59 = vbcast.lane.b32.xlu0 %v53, %s58
  %v60 = vpop.permute.xlu0 %59
  %v61 = vlaneseq
  %v62 = vshrl.u32 %v61, 7
  %v63 = vsub.s32 2, %v62
  %v64 = vrot.slane %v18, %v63
  %66 = vbcast.lane.b32.xlu0 %v64, 256
  %v67 = vpop.permute.xlu0 %66
  %s69 = sor.u32 256, 8
  %70 = vbcast.lane.b32.xlu0 %v64, %s69
  %v71 = vpop.permute.xlu0 %70
  %v72 = vlaneseq
  %v73 = vshrl.u32 %v72, 7
  %v74 = vsub.s32 3, %v73
  %v75 = vrot.slane %v18, %v74
  %77 = vbcast.lane.b32.xlu0 %v75, 256
  %v78 = vpop.permute.xlu0 %77
  %s80 = sor.u32 256, 8
  %81 = vbcast.lane.b32.xlu0 %v75, %s80
  %v82 = vpop.permute.xlu0 %81
  %v83 = vlaneseq
  %v84 = vshrl.u32 %v83, 7
  %v85 = vsub.s32 4, %v84
  %v86 = vrot.slane %v18, %v85
  %88 = vbcast.lane.b32.xlu0 %v86, 256
  %v89 = vpop.permute.xlu0 %88
  %s91 = sor.u32 256, 8
  %92 = vbcast.lane.b32.xlu0 %v86, %s91
  %v93 = vpop.permute.xlu0 %92
  %v94 = vlaneseq
  %v95 = vshrl.u32 %v94, 7
  %v96 = vsub.s32 5, %v95
  %v97 = vrot.slane %v18, %v96
  %99 = vbcast.lane.b32.xlu0 %v97, 256
  %v100 = vpop.permute.xlu0 %99
  %s102 = sor.u32 256, 8
  %103 = vbcast.lane.b32.xlu0 %v97, %s102
  %v104 = vpop.permute.xlu0 %103
  %v105 = vlaneseq
  %v106 = vshrl.u32 %v105, 7
  %v107 = vsub.s32 6, %v106
  %v108 = vrot.slane %v18, %v107
  %110 = vbcast.lane.b32.xlu0 %v108, 256
  %v111 = vpop.permute.xlu0 %110
  %s113 = sor.u32 256, 8
  %114 = vbcast.lane.b32.xlu0 %v108, %s113
  %v115 = vpop.permute.xlu0 %114
  %v116 = vlaneseq
  %v117 = vshrl.u32 %v116, 7
  %v118 = vsub.s32 7, %v117
  %v119 = vrot.slane %v18, %v118
  %121 = vbcast.lane.b32.xlu0 %v119, 256
  %v122 = vpop.permute.xlu0 %121
  %s124 = sor.u32 256, 8
  %125 = vbcast.lane.b32.xlu0 %v119, %s124
  %v126 = vpop.permute.xlu0 %125
  %v127 = vlaneseq
  %v128 = vshrl.u32 %v127, 7
  %v129 = vsub.s32 0, %v128
  %v130 = vrot.slane %v19, %v129
  %132 = vbcast.lane.b32.xlu0 %v130, 256
  %v133 = vpop.permute.xlu0 %132
  %s135 = sor.u32 256, 8
  %136 = vbcast.lane.b32.xlu0 %v130, %s135
  %v137 = vpop.permute.xlu0 %136
  %v138 = vlaneseq
  %v139 = vshrl.u32 %v138, 7
  %v140 = vsub.s32 1, %v139
  %v141 = vrot.slane %v19, %v140
  %143 = vbcast.lane.b32.xlu0 %v141, 256
  %v144 = vpop.permute.xlu0 %143
  %s146 = sor.u32 256, 8
  %147 = vbcast.lane.b32.xlu0 %v141, %s146
  %v148 = vpop.permute.xlu0 %147
  %v149 = vlaneseq
  %v150 = vshrl.u32 %v149, 7
  %v151 = vsub.s32 2, %v150
  %v152 = vrot.slane %v19, %v151
  %154 = vbcast.lane.b32.xlu0 %v152, 256
  %v155 = vpop.permute.xlu0 %154
  %s157 = sor.u32 256, 8
  %158 = vbcast.lane.b32.xlu0 %v152, %s157
  %v159 = vpop.permute.xlu0 %158
  %v160 = vlaneseq
  %v161 = vshrl.u32 %v160, 7
  %v162 = vsub.s32 3, %v161
  %v163 = vrot.slane %v19, %v162
  %165 = vbcast.lane.b32.xlu0 %v163, 256
  %v166 = vpop.permute.xlu0 %165
  %s168 = sor.u32 256, 8
  %169 = vbcast.lane.b32.xlu0 %v163, %s168
  %v170 = vpop.permute.xlu0 %169
  %v171 = vlaneseq
  %v172 = vshrl.u32 %v171, 7
  %v173 = vsub.s32 4, %v172
  %v174 = vrot.slane %v19, %v173
  %176 = vbcast.lane.b32.xlu0 %v174, 256
  %v177 = vpop.permute.xlu0 %176
  %s179 = sor.u32 256, 8
  %180 = vbcast.lane.b32.xlu0 %v174, %s179
  %v181 = vpop.permute.xlu0 %180
  %v182 = vlaneseq
  %v183 = vshrl.u32 %v182, 7
  %v184 = vsub.s32 5, %v183
  %v185 = vrot.slane %v19, %v184
  %187 = vbcast.lane.b32.xlu0 %v185, 256
  %v188 = vpop.permute.xlu0 %187
  %s190 = sor.u32 256, 8
  %191 = vbcast.lane.b32.xlu0 %v185, %s190
  %v192 = vpop.permute.xlu0 %191
  %v193 = vlaneseq
  %v194 = vshrl.u32 %v193, 7
  %v195 = vsub.s32 6, %v194
  %v196 = vrot.slane %v19, %v195
  %198 = vbcast.lane.b32.xlu0 %v196, 256
  %v199 = vpop.permute.xlu0 %198
  %s201 = sor.u32 256, 8
  %202 = vbcast.lane.b32.xlu0 %v196, %s201
  %v203 = vpop.permute.xlu0 %202
  %v204 = vlaneseq
  %v205 = vshrl.u32 %v204, 7
  %v206 = vsub.s32 7, %v205
  %v207 = vrot.slane %v19, %v206
  %209 = vbcast.lane.b32.xlu0 %v207, 256
  %v210 = vpop.permute.xlu0 %209
  %s212 = sor.u32 256, 8
  %213 = vbcast.lane.b32.xlu0 %v207, %s212
  %v214 = vpop.permute.xlu0 %213
  %v215 = vlaneseq
  %v216 = vshrl.u32 %v215, 7
  %v217 = vsub.s32 0, %v216
  %v218 = vrot.slane %v20, %v217
  %220 = vbcast.lane.b32.xlu0 %v218, 256
  %v221 = vpop.permute.xlu0 %220
  %s223 = sor.u32 256, 8
  %224 = vbcast.lane.b32.xlu0 %v218, %s223
  %v225 = vpop.permute.xlu0 %224
  %v226 = vlaneseq
  %v227 = vshrl.u32 %v226, 7
  %v228 = vsub.s32 1, %v227
  %v229 = vrot.slane %v20, %v228
  %231 = vbcast.lane.b32.xlu0 %v229, 256
  %v232 = vpop.permute.xlu0 %231
  %s234 = sor.u32 256, 8
  %235 = vbcast.lane.b32.xlu0 %v229, %s234
  %v236 = vpop.permute.xlu0 %235
  %v237 = vlaneseq
  %v238 = vshrl.u32 %v237, 7
  %v239 = vsub.s32 2, %v238
  %v240 = vrot.slane %v20, %v239
  %242 = vbcast.lane.b32.xlu0 %v240, 256
  %v243 = vpop.permute.xlu0 %242
  %s245 = sor.u32 256, 8
  %246 = vbcast.lane.b32.xlu0 %v240, %s245
  %v247 = vpop.permute.xlu0 %246
  %v248 = vlaneseq
  %v249 = vshrl.u32 %v248, 7
  %v250 = vsub.s32 3, %v249
  %v251 = vrot.slane %v20, %v250
  %253 = vbcast.lane.b32.xlu0 %v251, 256
  %v254 = vpop.permute.xlu0 %253
  %s256 = sor.u32 256, 8
  %257 = vbcast.lane.b32.xlu0 %v251, %s256
  %v258 = vpop.permute.xlu0 %257
  %v259 = vlaneseq
  %v260 = vshrl.u32 %v259, 7
  %v261 = vsub.s32 4, %v260
  %v262 = vrot.slane %v20, %v261
  %264 = vbcast.lane.b32.xlu0 %v262, 256
  %v265 = vpop.permute.xlu0 %264
  %s267 = sor.u32 256, 8
  %268 = vbcast.lane.b32.xlu0 %v262, %s267
  %v269 = vpop.permute.xlu0 %268
  %v270 = vlaneseq
  %v271 = vshrl.u32 %v270, 7
  %v272 = vsub.s32 5, %v271
  %v273 = vrot.slane %v20, %v272
  %275 = vbcast.lane.b32.xlu0 %v273, 256
  %v276 = vpop.permute.xlu0 %275
  %s278 = sor.u32 256, 8
  %279 = vbcast.lane.b32.xlu0 %v273, %s278
  %v280 = vpop.permute.xlu0 %279
  %v281 = vlaneseq
  %v282 = vshrl.u32 %v281, 7
  %v283 = vsub.s32 6, %v282
  %v284 = vrot.slane %v20, %v283
  %286 = vbcast.lane.b32.xlu0 %v284, 256
  %v287 = vpop.permute.xlu0 %286
  %s289 = sor.u32 256, 8
  %290 = vbcast.lane.b32.xlu0 %v284, %s289
  %v291 = vpop.permute.xlu0 %290
  %v292 = vlaneseq
  %v293 = vshrl.u32 %v292, 7
  %v294 = vsub.s32 7, %v293
  %v295 = vrot.slane %v20, %v294
  %297 = vbcast.lane.b32.xlu0 %v295, 256
  %v298 = vpop.permute.xlu0 %297
  %s300 = sor.u32 256, 8
  %301 = vbcast.lane.b32.xlu0 %v295, %s300
  %v302 = vpop.permute.xlu0 %301
  %vm303 = vcmp.eq.s32.totalorder %v45, %v38
  %vm304 = vcmp.eq.s32.totalorder %v49, %v38
  %vm305 = vcmp.eq.s32.totalorder %v56, %v38
  %vm306 = vcmp.eq.s32.totalorder %v60, %v38
  %vm307 = vcmp.eq.s32.totalorder %v67, %v38
  %vm308 = vcmp.eq.s32.totalorder %v71, %v38
  %vm309 = vcmp.eq.s32.totalorder %v78, %v38
  %vm310 = vcmp.eq.s32.totalorder %v82, %v38
  %vm311 = vcmp.eq.s32.totalorder %v89, %v38
  %vm312 = vcmp.eq.s32.totalorder %v93, %v38
  %vm313 = vcmp.eq.s32.totalorder %v100, %v38
  %vm314 = vcmp.eq.s32.totalorder %v104, %v38
  %vm315 = vcmp.eq.s32.totalorder %v111, %v38
  %vm316 = vcmp.eq.s32.totalorder %v115, %v38
  %vm317 = vcmp.eq.s32.totalorder %v122, %v38
  %vm318 = vcmp.eq.s32.totalorder %v126, %v38
  %vm319 = vcmp.eq.s32.totalorder %v133, %v38
  %vm320 = vcmp.eq.s32.totalorder %v137, %v38
  %vm321 = vcmp.eq.s32.totalorder %v144, %v38
  %vm322 = vcmp.eq.s32.totalorder %v148, %v38
  %vm323 = vcmp.eq.s32.totalorder %v155, %v38
  %vm324 = vcmp.eq.s32.totalorder %v159, %v38
  %vm325 = vcmp.eq.s32.totalorder %v166, %v38
  %vm326 = vcmp.eq.s32.totalorder %v170, %v38
  %vm327 = vcmp.eq.s32.totalorder %v177, %v38
  %vm328 = vcmp.eq.s32.totalorder %v181, %v38
  %vm329 = vcmp.eq.s32.totalorder %v188, %v38
  %vm330 = vcmp.eq.s32.totalorder %v192, %v38
  %vm331 = vcmp.eq.s32.totalorder %v199, %v38
  %vm332 = vcmp.eq.s32.totalorder %v203, %v38
  %vm333 = vcmp.eq.s32.totalorder %v210, %v38
  %vm334 = vcmp.eq.s32.totalorder %v214, %v38
  %vm335 = vcmp.eq.s32.totalorder %v221, %v38
  %vm336 = vcmp.eq.s32.totalorder %v225, %v38
  %vm337 = vcmp.eq.s32.totalorder %v232, %v38
  %vm338 = vcmp.eq.s32.totalorder %v236, %v38
  %vm339 = vcmp.eq.s32.totalorder %v243, %v38
  %vm340 = vcmp.eq.s32.totalorder %v247, %v38
  %vm341 = vcmp.eq.s32.totalorder %v254, %v38
  %vm342 = vcmp.eq.s32.totalorder %v258, %v38
  %vm343 = vcmp.eq.s32.totalorder %v265, %v38
  %vm344 = vcmp.eq.s32.totalorder %v269, %v38
  %vm345 = vcmp.eq.s32.totalorder %v276, %v38
  %vm346 = vcmp.eq.s32.totalorder %v280, %v38
  %vm347 = vcmp.eq.s32.totalorder %v287, %v38
  %vm348 = vcmp.eq.s32.totalorder %v291, %v38
  %vm349 = vcmp.eq.s32.totalorder %v298, %v38
  %vm350 = vcmp.eq.s32.totalorder %v302, %v38
  %v351 = vsel %vm303, 1, 0
  %v352 = vsel %vm304, 1, 0
  %v353 = vsel %vm305, 1, 0
  %v354 = vsel %vm306, 1, 0
  %v355 = vsel %vm307, 1, 0
  %v356 = vsel %vm308, 1, 0
  %v357 = vsel %vm309, 1, 0
  %v358 = vsel %vm310, 1, 0
  %v359 = vsel %vm311, 1, 0
  %v360 = vsel %vm312, 1, 0
  %v361 = vsel %vm313, 1, 0
  %v362 = vsel %vm314, 1, 0
  %v363 = vsel %vm315, 1, 0
  %v364 = vsel %vm316, 1, 0
  %v365 = vsel %vm317, 1, 0
  %v366 = vsel %vm318, 1, 0
  %v367 = vsel %vm319, 1, 0
  %v368 = vsel %vm320, 1, 0
  %v369 = vsel %vm321, 1, 0
  %v370 = vsel %vm322, 1, 0
  %v371 = vsel %vm323, 1, 0
  %v372 = vsel %vm324, 1, 0
  %v373 = vsel %vm325, 1, 0
  %v374 = vsel %vm326, 1, 0
  %v375 = vsel %vm327, 1, 0
  %v376 = vsel %vm328, 1, 0
  %v377 = vsel %vm329, 1, 0
  %v378 = vsel %vm330, 1, 0
  %v379 = vsel %vm331, 1, 0
  %v380 = vsel %vm332, 1, 0
  %v381 = vsel %vm333, 1, 0
  %v382 = vsel %vm334, 1, 0
  %v383 = vsel %vm335, 1, 0
  %v384 = vsel %vm336, 1, 0
  %v385 = vsel %vm337, 1, 0
  %v386 = vsel %vm338, 1, 0
  %v387 = vsel %vm339, 1, 0
  %v388 = vsel %vm340, 1, 0
  %v389 = vsel %vm341, 1, 0
  %v390 = vsel %vm342, 1, 0
  %v391 = vsel %vm343, 1, 0
  %v392 = vsel %vm344, 1, 0
  %v393 = vsel %vm345, 1, 0
  %v394 = vsel %vm346, 1, 0
  %v395 = vsel %vm347, 1, 0
  %v396 = vsel %vm348, 1, 0
  %v397 = vsel %vm349, 1, 0
  %v398 = vsel %vm350, 1, 0
  %v399 = vcvt.s32.f32 %v351
  %v400 = vcvt.s32.f32 %v352
  %v401 = vcvt.s32.f32 %v353
  %v402 = vcvt.s32.f32 %v354
  %v403 = vcvt.s32.f32 %v355
  %v404 = vcvt.s32.f32 %v356
  %v405 = vcvt.s32.f32 %v357
  %v406 = vcvt.s32.f32 %v358
  %v407 = vcvt.s32.f32 %v359
  %v408 = vcvt.s32.f32 %v360
  %v409 = vcvt.s32.f32 %v361
  %v410 = vcvt.s32.f32 %v362
  %v411 = vcvt.s32.f32 %v363
  %v412 = vcvt.s32.f32 %v364
  %v413 = vcvt.s32.f32 %v365
  %v414 = vcvt.s32.f32 %v366
  %v415 = vcvt.s32.f32 %v367
  %v416 = vcvt.s32.f32 %v368
  %v417 = vcvt.s32.f32 %v369
  %v418 = vcvt.s32.f32 %v370
  %v419 = vcvt.s32.f32 %v371
  %v420 = vcvt.s32.f32 %v372
  %v421 = vcvt.s32.f32 %v373
  %v422 = vcvt.s32.f32 %v374
  %v423 = vcvt.s32.f32 %v375
  %v424 = vcvt.s32.f32 %v376
  %v425 = vcvt.s32.f32 %v377
  %v426 = vcvt.s32.f32 %v378
  %v427 = vcvt.s32.f32 %v379
  %v428 = vcvt.s32.f32 %v380
  %v429 = vcvt.s32.f32 %v381
  %v430 = vcvt.s32.f32 %v382
  %v431 = vcvt.s32.f32 %v383
  %v432 = vcvt.s32.f32 %v384
  %v433 = vcvt.s32.f32 %v385
  %v434 = vcvt.s32.f32 %v386
  %v435 = vcvt.s32.f32 %v387
  %v436 = vcvt.s32.f32 %v388
  %v437 = vcvt.s32.f32 %v389
  %v438 = vcvt.s32.f32 %v390
  %v439 = vcvt.s32.f32 %v391
  %v440 = vcvt.s32.f32 %v392
  %v441 = vcvt.s32.f32 %v393
  %v442 = vcvt.s32.f32 %v394
  %v443 = vcvt.s32.f32 %v395
  %v444 = vcvt.s32.f32 %v396
  %v445 = vcvt.s32.f32 %v397
  %v446 = vcvt.s32.f32 %v398
  %v447 = vpack.c.bf16 %v400, %v399
  %v448 = vpack.c.bf16 %v402, %v401
  %v449 = vpack.c.bf16 %v404, %v403
  %v450 = vpack.c.bf16 %v406, %v405
  %v451 = vpack.c.bf16 %v408, %v407
  %v452 = vpack.c.bf16 %v410, %v409
  %v453 = vpack.c.bf16 %v412, %v411
  %v454 = vpack.c.bf16 %v414, %v413
  %v455 = vpack.c.bf16 %v416, %v415
  %v456 = vpack.c.bf16 %v418, %v417
  %v457 = vpack.c.bf16 %v420, %v419
  %v458 = vpack.c.bf16 %v422, %v421
  %v459 = vpack.c.bf16 %v424, %v423
  %v460 = vpack.c.bf16 %v426, %v425
  %v461 = vpack.c.bf16 %v428, %v427
  %v462 = vpack.c.bf16 %v430, %v429
  %v463 = vpack.c.bf16 %v432, %v431
  %v464 = vpack.c.bf16 %v434, %v433
  %v465 = vpack.c.bf16 %v436, %v435
  %v466 = vpack.c.bf16 %v438, %v437
  %v467 = vpack.c.bf16 %v440, %v439
  %v468 = vpack.c.bf16 %v442, %v441
  %v469 = vpack.c.bf16 %v444, %v443
  %v470 = vpack.c.bf16 %v446, %v445
  %v471 = vld [vmem:[%s2] sm:$0x1]
  %v473 = vlaneseq
  %v474 = vshrl.u32 %v473, 7
  %v475 = vsub.s32 0, %v474
  %v476 = vrot.slane %v471, %v475
  %v494 = vunpack.c.l.b16 %v21
  %v495 = vunpack.c.l.b16 %v22
  %v496 = vunpack.c.l.b16 %v23
  %v497 = vunpack.c.l.b16 %v24
  %v498 = vunpack.c.l.b16 %v25
  %v499 = vunpack.c.l.b16 %v26
  %v500 = vunpack.c.l.b16 %v27
  %v501 = vunpack.c.l.b16 %v28
  %v502 = vunpack.c.l.b16 %v29
  %v503 = vunpack.c.l.b16 %v30
  %v504 = vunpack.c.l.b16 %v31
  %v505 = vunpack.c.l.b16 %v32
  %v506 = vunpack.c.l.b16 %v33
  %v507 = vunpack.c.l.b16 %v34
  %v508 = vunpack.c.l.b16 %v35
  %v509 = vunpack.c.l.b16 %v36
  %v510 = vpack.c.b16 %v495, %v494
  %v511 = vpack.c.b16 %v497, %v496
  %v512 = vpack.c.b16 %v499, %v498
  %v513 = vpack.c.b16 %v501, %v500
  %v514 = vpack.c.b16 %v503, %v502
  %v515 = vpack.c.b16 %v505, %v504
  %v516 = vpack.c.b16 %v507, %v506
  %v517 = vpack.c.b16 %v509, %v508
  %526 = vmatprep.subr.bf16.mxu0 0
  %527 = vmatpush1.bf16.msra.mxu0 %v510
  %528 = vmatprep.subr.bf16.mxu0 0
  %529 = vmatpush1.bf16.msra.mxu0 %v511
  %530 = vmatprep.subr.bf16.mxu0 0
  %531 = vmatpush1.bf16.msra.mxu0 %v512
  %532 = vmatprep.subr.bf16.mxu0 0
  %533 = vmatpush1.bf16.msra.mxu0 %v513
  %534 = vmatprep.subr.bf16.mxu0 0
  %535 = vmatpush1.bf16.msra.mxu0 %v514
  %536 = vmatprep.subr.bf16.mxu0 0
  %537 = vmatpush1.bf16.msra.mxu0 %v515
  %538 = vmatprep.subr.bf16.mxu0 0
  %539 = vmatpush1.bf16.msra.mxu0 %v516
  %540 = vmatprep.subr.bf16.mxu0 0
  %541 = vmatpush1.bf16.msra.mxu0 %v517
  %542 = vmatprep.subr.bf16.mxu0 0
  %543 = vmatpush1.bf16.msra.mxu0 0
  %544 = vmatprep.subr.bf16.mxu0 0
  %545 = vmatpush1.bf16.msra.mxu0 0
  %546 = vmatprep.subr.bf16.mxu0 0
  %547 = vmatpush1.bf16.msra.mxu0 0
  %548 = vmatprep.subr.bf16.mxu0 0
  %549 = vmatpush1.bf16.msra.mxu0 0
  %550 = vmatprep.subr.bf16.mxu0 0
  %551 = vmatpush1.bf16.msra.mxu0 0
  %552 = vmatprep.subr.bf16.mxu0 0
  %553 = vmatpush1.bf16.msra.mxu0 0
  %554 = vmatprep.subr.bf16.mxu0 0
  %555 = vmatpush1.bf16.msra.mxu0 0
  %556 = vmatprep.subr.bf16.mxu0 0
  %557 = vmatpush1.bf16.msra.mxu0 0
  %558 = vmatprep.mubr.bf16.mxu0 0
  %559 = vmatmul.mubr.bf16.gmra.mrb[0].mxu0 %v447
  %v560 = vpop.f32.mrb[0].mxu0
  %v561 = vadd.f32 %v476, %v560
  %v562 = vpop.f32.mrb[0].mxu0
  %v563 = vpop.f32.mrb[0].mxu0
  %v564 = vadd.f32 %v476, %v563
  %v565 = vpop.f32.mrb[0].mxu0
  %566 = vmatprep.mubr.bf16.mxu0 0
  %567 = vmatmul.mubr.bf16.gmra.mrb[0].mxu0 %v448
  %v568 = vpop.f32.mrb[0].mxu0
  %v569 = vadd.f32 %v476, %v568
  %v570 = vpop.f32.mrb[0].mxu0
  %v571 = vpop.f32.mrb[0].mxu0
  %v572 = vadd.f32 %v476, %v571
  %v573 = vpop.f32.mrb[0].mxu0
  %574 = vmatprep.mubr.bf16.mxu0 0
  %575 = vmatmul.mubr.bf16.gmra.mrb[0].mxu0 %v449
  %v576 = vpop.f32.mrb[0].mxu0
  %v577 = vadd.f32 %v476, %v576
  %v578 = vpop.f32.mrb[0].mxu0
  %v579 = vpop.f32.mrb[0].mxu0
  %v580 = vadd.f32 %v476, %v579
  %v581 = vpop.f32.mrb[0].mxu0
  %582 = vmatprep.mubr.bf16.mxu0 0
  %583 = vmatmul.mubr.bf16.gmra.mrb[0].mxu0 %v450
  %v584 = vpop.f32.mrb[0].mxu0
  %v585 = vadd.f32 %v476, %v584
  %v586 = vpop.f32.mrb[0].mxu0
  %v587 = vpop.f32.mrb[0].mxu0
  %v588 = vadd.f32 %v476, %v587
  %v589 = vpop.f32.mrb[0].mxu0
  %590 = vmatprep.mubr.bf16.mxu0 0
  %591 = vmatmul.mubr.bf16.gmra.mrb[0].mxu0 %v451
  %v592 = vpop.f32.mrb[0].mxu0
  %v593 = vadd.f32 %v476, %v592
  %v594 = vpop.f32.mrb[0].mxu0
  %v595 = vpop.f32.mrb[0].mxu0
  %v596 = vadd.f32 %v476, %v595
  %v597 = vpop.f32.mrb[0].mxu0
  %598 = vmatprep.mubr.bf16.mxu0 0
  %599 = vmatmul.mubr.bf16.gmra.mrb[0].mxu0 %v452
  %v600 = vpop.f32.mrb[0].mxu0
  %v601 = vadd.f32 %v476, %v600
  %v602 = vpop.f32.mrb[0].mxu0
  %v603 = vpop.f32.mrb[0].mxu0
  %v604 = vadd.f32 %v476, %v603
  %v605 = vpop.f32.mrb[0].mxu0
  %606 = vmatprep.mubr.bf16.mxu0 0
  %607 = vmatmul.mubr.bf16.gmra.mrb[0].mxu0 %v453
  %v608 = vpop.f32.mrb[0].mxu0
  %v609 = vadd.f32 %v476, %v608
  %v610 = vpop.f32.mrb[0].mxu0
  %v611 = vpop.f32.mrb[0].mxu0
  %v612 = vadd.f32 %v476, %v611
  %v613 = vpop.f32.mrb[0].mxu0
  %614 = vmatprep.mubr.bf16.mxu0 0
  %615 = vmatmul.mubr.bf16.gmra.mrb[0].mxu0 %v454
  %v616 = vpop.f32.mrb[0].mxu0
  %v617 = vadd.f32 %v476, %v616
  %v618 = vpop.f32.mrb[0].mxu0
  %v619 = vpop.f32.mrb[0].mxu0
  %v620 = vadd.f32 %v476, %v619
  %v621 = vpop.f32.mrb[0].mxu0
  %622 = vmatprep.mubr.bf16.mxu0 0
  %623 = vmatmul.mubr.bf16.gmra.mrb[0].mxu0 %v455
  %v624 = vpop.f32.mrb[0].mxu0
  %v625 = vadd.f32 %v476, %v624
  %v626 = vpop.f32.mrb[0].mxu0
  %v627 = vpop.f32.mrb[0].mxu0
  %v628 = vadd.f32 %v476, %v627
  %v629 = vpop.f32.mrb[0].mxu0
  %630 = vmatprep.mubr.bf16.mxu0 0
  %631 = vmatmul.mubr.bf16.gmra.mrb[0].mxu0 %v456
  %v632 = vpop.f32.mrb[0].mxu0
  %v633 = vadd.f32 %v476, %v632
  %v634 = vpop.f32.mrb[0].mxu0
  %v635 = vpop.f32.mrb[0].mxu0
  %v636 = vadd.f32 %v476, %v635
  %v637 = vpop.f32.mrb[0].mxu0
  %638 = vmatprep.mubr.bf16.mxu0 0
  %639 = vmatmul.mubr.bf16.gmra.mrb[0].mxu0 %v457
  %v640 = vpop.f32.mrb[0].mxu0
  %v641 = vadd.f32 %v476, %v640
  %v642 = vpop.f32.mrb[0].mxu0
  %v643 = vpop.f32.mrb[0].mxu0
  %v644 = vadd.f32 %v476, %v643
  %v645 = vpop.f32.mrb[0].mxu0
  %646 = vmatprep.mubr.bf16.mxu0 0
  %647 = vmatmul.mubr.bf16.gmra.mrb[0].mxu0 %v458
  %v648 = vpop.f32.mrb[0].mxu0
  %v649 = vadd.f32 %v476, %v648
  %v650 = vpop.f32.mrb[0].mxu0
  %v651 = vpop.f32.mrb[0].mxu0
  %v652 = vadd.f32 %v476, %v651
  %v653 = vpop.f32.mrb[0].mxu0
  %654 = vmatprep.mubr.bf16.mxu0 0
  %655 = vmatmul.mubr.bf16.gmra.mrb[0].mxu0 %v459
  %v656 = vpop.f32.mrb[0].mxu0
  %v657 = vadd.f32 %v476, %v656
  %v658 = vpop.f32.mrb[0].mxu0
  %v659 = vpop.f32.mrb[0].mxu0
  %v660 = vadd.f32 %v476, %v659
  %v661 = vpop.f32.mrb[0].mxu0
  %662 = vmatprep.mubr.bf16.mxu0 0
  %663 = vmatmul.mubr.bf16.gmra.mrb[0].mxu0 %v460
  %v664 = vpop.f32.mrb[0].mxu0
  %v665 = vadd.f32 %v476, %v664
  %v666 = vpop.f32.mrb[0].mxu0
  %v667 = vpop.f32.mrb[0].mxu0
  %v668 = vadd.f32 %v476, %v667
  %v669 = vpop.f32.mrb[0].mxu0
  %670 = vmatprep.mubr.bf16.mxu0 0
  %671 = vmatmul.mubr.bf16.gmra.mrb[0].mxu0 %v461
  %v672 = vpop.f32.mrb[0].mxu0
  %v673 = vadd.f32 %v476, %v672
  %v674 = vpop.f32.mrb[0].mxu0
  %v675 = vpop.f32.mrb[0].mxu0
  %v676 = vadd.f32 %v476, %v675
  %v677 = vpop.f32.mrb[0].mxu0
  %678 = vmatprep.mubr.bf16.mxu0 0
  %679 = vmatmul.mubr.bf16.gmra.mrb[0].mxu0 %v462
  %v680 = vpop.f32.mrb[0].mxu0
  %v681 = vadd.f32 %v476, %v680
  %v682 = vpop.f32.mrb[0].mxu0
  %v683 = vpop.f32.mrb[0].mxu0
  %v684 = vadd.f32 %v476, %v683
  %v685 = vpop.f32.mrb[0].mxu0
  %686 = vmatprep.mubr.bf16.mxu0 0
  %687 = vmatmul.mubr.bf16.gmra.mrb[0].mxu0 %v463
  %v688 = vpop.f32.mrb[0].mxu0
  %v689 = vadd.f32 %v476, %v688
  %v690 = vpop.f32.mrb[0].mxu0
  %v691 = vpop.f32.mrb[0].mxu0
  %v692 = vadd.f32 %v476, %v691
  %v693 = vpop.f32.mrb[0].mxu0
  %694 = vmatprep.mubr.bf16.mxu0 0
  %695 = vmatmul.mubr.bf16.gmra.mrb[0].mxu0 %v464
  %v696 = vpop.f32.mrb[0].mxu0
  %v697 = vadd.f32 %v476, %v696
  %v698 = vpop.f32.mrb[0].mxu0
  %v699 = vpop.f32.mrb[0].mxu0
  %v700 = vadd.f32 %v476, %v699
  %v701 = vpop.f32.mrb[0].mxu0
  %702 = vmatprep.mubr.bf16.mxu0 0
  %703 = vmatmul.mubr.bf16.gmra.mrb[0].mxu0 %v465
  %v704 = vpop.f32.mrb[0].mxu0
  %v705 = vadd.f32 %v476, %v704
  %v706 = vpop.f32.mrb[0].mxu0
  %v707 = vpop.f32.mrb[0].mxu0
  %v708 = vadd.f32 %v476, %v707
  %v709 = vpop.f32.mrb[0].mxu0
  %710 = vmatprep.mubr.bf16.mxu0 0
  %711 = vmatmul.mubr.bf16.gmra.mrb[0].mxu0 %v466
  %v712 = vpop.f32.mrb[0].mxu0
  %v713 = vadd.f32 %v476, %v712
  %v714 = vpop.f32.mrb[0].mxu0
  %v715 = vpop.f32.mrb[0].mxu0
  %v716 = vadd.f32 %v476, %v715
  %v717 = vpop.f32.mrb[0].mxu0
  %718 = vmatprep.mubr.bf16.mxu0 0
  %719 = vmatmul.mubr.bf16.gmra.mrb[0].mxu0 %v467
  %v720 = vpop.f32.mrb[0].mxu0
  %v721 = vadd.f32 %v476, %v720
  %v722 = vpop.f32.mrb[0].mxu0
  %v723 = vpop.f32.mrb[0].mxu0
  %v724 = vadd.f32 %v476, %v723
  %v725 = vpop.f32.mrb[0].mxu0
  %726 = vmatprep.mubr.bf16.mxu0 0
  %727 = vmatmul.mubr.bf16.gmra.mrb[0].mxu0 %v468
  %v728 = vpop.f32.mrb[0].mxu0
  %v729 = vadd.f32 %v476, %v728
  %v730 = vpop.f32.mrb[0].mxu0
  %v731 = vpop.f32.mrb[0].mxu0
  %v732 = vadd.f32 %v476, %v731
  %v733 = vpop.f32.mrb[0].mxu0
  %734 = vmatprep.mubr.bf16.mxu0 0
  %735 = vmatmul.mubr.bf16.gmra.mrb[0].mxu0 %v469
  %v736 = vpop.f32.mrb[0].mxu0
  %v737 = vadd.f32 %v476, %v736
  %v738 = vpop.f32.mrb[0].mxu0
  %v739 = vpop.f32.mrb[0].mxu0
  %v740 = vadd.f32 %v476, %v739
  %v741 = vpop.f32.mrb[0].mxu0
  %742 = vmatprep.mubr.bf16.mxu0 0
  %743 = vmatmul.mubr.bf16.gmra.mrb[0].mxu0 %v470
  %v744 = vpop.f32.mrb[0].mxu0
  %v745 = vadd.f32 %v476, %v744
  %v746 = vpop.f32.mrb[0].mxu0
  %v747 = vpop.f32.mrb[0].mxu0
  %v748 = vadd.f32 %v476, %v747
  %v749 = vpop.f32.mrb[0].mxu0
  %750 = vdwg.mxu0
  %v751 = vpack.c.bf16 %v564, %v561
  %v752 = vpack.c.bf16 %v572, %v569
  %v753 = vpack.c.bf16 %v580, %v577
  %v754 = vpack.c.bf16 %v588, %v585
  %v755 = vpack.c.bf16 %v596, %v593
  %v756 = vpack.c.bf16 %v604, %v601
  %v757 = vpack.c.bf16 %v612, %v609
  %v758 = vpack.c.bf16 %v620, %v617
  %v759 = vpack.c.bf16 %v628, %v625
  %v760 = vpack.c.bf16 %v636, %v633
  %v761 = vpack.c.bf16 %v644, %v641
  %v762 = vpack.c.bf16 %v652, %v649
  %v763 = vpack.c.bf16 %v660, %v657
  %v764 = vpack.c.bf16 %v668, %v665
  %v765 = vpack.c.bf16 %v676, %v673
  %v766 = vpack.c.bf16 %v684, %v681
  %v767 = vpack.c.bf16 %v692, %v689
  %v768 = vpack.c.bf16 %v700, %v697
  %v769 = vpack.c.bf16 %v708, %v705
  %v770 = vpack.c.bf16 %v716, %v713
  %v771 = vpack.c.bf16 %v724, %v721
  %v772 = vpack.c.bf16 %v732, %v729
  %v773 = vpack.c.bf16 %v740, %v737
  %v774 = vpack.c.bf16 %v748, %v745
  %v775 = vtanh.bf16.pop %v751
  %v776 = vtanh.bf16.pop %v752
  %v777 = vtanh.bf16.pop %v753
  %v778 = vtanh.bf16.pop %v754
  %v779 = vtanh.bf16.pop %v755
  %v780 = vtanh.bf16.pop %v756
  %v781 = vtanh.bf16.pop %v757
  %v782 = vtanh.bf16.pop %v758
  %v783 = vtanh.bf16.pop %v759
  %v784 = vtanh.bf16.pop %v760
  %v785 = vtanh.bf16.pop %v761
  %v786 = vtanh.bf16.pop %v762
  %v787 = vtanh.bf16.pop %v763
  %v788 = vtanh.bf16.pop %v764
  %v789 = vtanh.bf16.pop %v765
  %v790 = vtanh.bf16.pop %v766
  %v791 = vtanh.bf16.pop %v767
  %v792 = vtanh.bf16.pop %v768
  %v793 = vtanh.bf16.pop %v769
  %v794 = vtanh.bf16.pop %v770
  %v795 = vtanh.bf16.pop %v771
  %v796 = vtanh.bf16.pop %v772
  %v797 = vtanh.bf16.pop %v773
  %v798 = vtanh.bf16.pop %v774
  %v799 = vunpack.c.l.bf16 %v775
  %v800 = vunpack.c.h.bf16 %v775
  %v801 = vunpack.c.l.bf16 %v776
  %v802 = vunpack.c.h.bf16 %v776
  %v803 = vunpack.c.l.bf16 %v777
  %v804 = vunpack.c.h.bf16 %v777
  %v805 = vunpack.c.l.bf16 %v778
  %v806 = vunpack.c.h.bf16 %v778
  %v807 = vunpack.c.l.bf16 %v779
  %v808 = vunpack.c.h.bf16 %v779
  %v809 = vunpack.c.l.bf16 %v780
  %v810 = vunpack.c.h.bf16 %v780
  %v811 = vunpack.c.l.bf16 %v781
  %v812 = vunpack.c.h.bf16 %v781
  %v813 = vunpack.c.l.bf16 %v782
  %v814 = vunpack.c.h.bf16 %v782
  %v815 = vunpack.c.l.bf16 %v783
  %v816 = vunpack.c.h.bf16 %v783
  %v817 = vunpack.c.l.bf16 %v784
  %v818 = vunpack.c.h.bf16 %v784
  %v819 = vunpack.c.l.bf16 %v785
  %v820 = vunpack.c.h.bf16 %v785
  %v821 = vunpack.c.l.bf16 %v786
  %v822 = vunpack.c.h.bf16 %v786
  %v823 = vunpack.c.l.bf16 %v787
  %v824 = vunpack.c.h.bf16 %v787
  %v825 = vunpack.c.l.bf16 %v788
  %v826 = vunpack.c.h.bf16 %v788
  %v827 = vunpack.c.l.bf16 %v789
  %v828 = vunpack.c.h.bf16 %v789
  %v829 = vunpack.c.l.bf16 %v790
  %v830 = vunpack.c.h.bf16 %v790
  %v831 = vunpack.c.l.bf16 %v791
  %v832 = vunpack.c.h.bf16 %v791
  %v833 = vunpack.c.l.bf16 %v792
  %v834 = vunpack.c.h.bf16 %v792
  %v835 = vunpack.c.l.bf16 %v793
  %v836 = vunpack.c.h.bf16 %v793
  %v837 = vunpack.c.l.bf16 %v794
  %v838 = vunpack.c.h.bf16 %v794
  %v839 = vunpack.c.l.bf16 %v795
  %v840 = vunpack.c.h.bf16 %v795
  %v841 = vunpack.c.l.bf16 %v796
  %v842 = vunpack.c.h.bf16 %v796
  %v843 = vunpack.c.l.bf16 %v797
  %v844 = vunpack.c.h.bf16 %v797
  %v845 = vunpack.c.l.bf16 %v798
  %v846 = vunpack.c.h.bf16 %v798
  %v847 = vld [vmem:[%s3] sm:$0x1]
  %v849 = vlaneseq
  %v850 = vshrl.u32 %v849, 7
  %v851 = vsub.s32 0, %v850
  %v852 = vrot.slane %v847, %v851
  %v854 = vmul.f32 %v799, %v852
  %v855 = vmul.f32 %v800, %v852
  %v856 = vmul.f32 %v801, %v852
  %v857 = vmul.f32 %v802, %v852
  %v858 = vmul.f32 %v803, %v852
  %v859 = vmul.f32 %v804, %v852
  %v860 = vmul.f32 %v805, %v852
  %v861 = vmul.f32 %v806, %v852
  %v862 = vmul.f32 %v807, %v852
  %v863 = vmul.f32 %v808, %v852
  %v864 = vmul.f32 %v809, %v852
  %v865 = vmul.f32 %v810, %v852
  %v866 = vmul.f32 %v811, %v852
  %v867 = vmul.f32 %v812, %v852
  %v868 = vmul.f32 %v813, %v852
  %v869 = vmul.f32 %v814, %v852
  %v870 = vmul.f32 %v815, %v852
  %v871 = vmul.f32 %v816, %v852
  %v872 = vmul.f32 %v817, %v852
  %v873 = vmul.f32 %v818, %v852
  %v874 = vmul.f32 %v819, %v852
  %v875 = vmul.f32 %v820, %v852
  %v876 = vmul.f32 %v821, %v852
  %v877 = vmul.f32 %v822, %v852
  %v878 = vmul.f32 %v823, %v852
  %v879 = vmul.f32 %v824, %v852
  %v880 = vmul.f32 %v825, %v852
  %v881 = vmul.f32 %v826, %v852
  %v882 = vmul.f32 %v827, %v852
  %v883 = vmul.f32 %v828, %v852
  %v884 = vmul.f32 %v829, %v852
  %v885 = vmul.f32 %v830, %v852
  %v886 = vmul.f32 %v831, %v852
  %v887 = vmul.f32 %v832, %v852
  %v888 = vmul.f32 %v833, %v852
  %v889 = vmul.f32 %v834, %v852
  %v890 = vmul.f32 %v835, %v852
  %v891 = vmul.f32 %v836, %v852
  %v892 = vmul.f32 %v837, %v852
  %v893 = vmul.f32 %v838, %v852
  %v894 = vmul.f32 %v839, %v852
  %v895 = vmul.f32 %v840, %v852
  %v896 = vmul.f32 %v841, %v852
  %v897 = vmul.f32 %v842, %v852
  %v898 = vmul.f32 %v843, %v852
  %v899 = vmul.f32 %v844, %v852
  %v900 = vmul.f32 %v845, %v852
  %v901 = vmul.f32 %v846, %v852
  %902 = vadd.xlane.f32.xlu0 %v854
  %v903 = vpop.xlane.xlu0 %902
  %904 = vadd.xlane.f32.xlu0 %v855
  %v905 = vpop.xlane.xlu0 %904
  %906 = vadd.xlane.f32.xlu0 %v856
  %v907 = vpop.xlane.xlu0 %906
  %908 = vadd.xlane.f32.xlu0 %v857
  %v909 = vpop.xlane.xlu0 %908
  %910 = vadd.xlane.f32.xlu0 %v858
  %v911 = vpop.xlane.xlu0 %910
  %912 = vadd.xlane.f32.xlu0 %v859
  %v913 = vpop.xlane.xlu0 %912
  %914 = vadd.xlane.f32.xlu0 %v860
  %v915 = vpop.xlane.xlu0 %914
  %916 = vadd.xlane.f32.xlu0 %v861
  %v917 = vpop.xlane.xlu0 %916
  %918 = vadd.xlane.f32.xlu0 %v862
  %v919 = vpop.xlane.xlu0 %918
  %920 = vadd.xlane.f32.xlu0 %v863
  %v921 = vpop.xlane.xlu0 %920
  %922 = vadd.xlane.f32.xlu0 %v864
  %v923 = vpop.xlane.xlu0 %922
  %924 = vadd.xlane.f32.xlu0 %v865
  %v925 = vpop.xlane.xlu0 %924
  %926 = vadd.xlane.f32.xlu0 %v866
  %v927 = vpop.xlane.xlu0 %926
  %928 = vadd.xlane.f32.xlu0 %v867
  %v929 = vpop.xlane.xlu0 %928
  %930 = vadd.xlane.f32.xlu0 %v868
  %v931 = vpop.xlane.xlu0 %930
  %932 = vadd.xlane.f32.xlu0 %v869
  %v933 = vpop.xlane.xlu0 %932
  %934 = vadd.xlane.f32.xlu0 %v870
  %v935 = vpop.xlane.xlu0 %934
  %936 = vadd.xlane.f32.xlu0 %v871
  %v937 = vpop.xlane.xlu0 %936
  %938 = vadd.xlane.f32.xlu0 %v872
  %v939 = vpop.xlane.xlu0 %938
  %940 = vadd.xlane.f32.xlu0 %v873
  %v941 = vpop.xlane.xlu0 %940
  %942 = vadd.xlane.f32.xlu0 %v874
  %v943 = vpop.xlane.xlu0 %942
  %944 = vadd.xlane.f32.xlu0 %v875
  %v945 = vpop.xlane.xlu0 %944
  %946 = vadd.xlane.f32.xlu0 %v876
  %v947 = vpop.xlane.xlu0 %946
  %948 = vadd.xlane.f32.xlu0 %v877
  %v949 = vpop.xlane.xlu0 %948
  %950 = vadd.xlane.f32.xlu0 %v878
  %v951 = vpop.xlane.xlu0 %950
  %952 = vadd.xlane.f32.xlu0 %v879
  %v953 = vpop.xlane.xlu0 %952
  %954 = vadd.xlane.f32.xlu0 %v880
  %v955 = vpop.xlane.xlu0 %954
  %956 = vadd.xlane.f32.xlu0 %v881
  %v957 = vpop.xlane.xlu0 %956
  %958 = vadd.xlane.f32.xlu0 %v882
  %v959 = vpop.xlane.xlu0 %958
  %960 = vadd.xlane.f32.xlu0 %v883
  %v961 = vpop.xlane.xlu0 %960
  %962 = vadd.xlane.f32.xlu0 %v884
  %v963 = vpop.xlane.xlu0 %962
  %964 = vadd.xlane.f32.xlu0 %v885
  %v965 = vpop.xlane.xlu0 %964
  %966 = vadd.xlane.f32.xlu0 %v886
  %v967 = vpop.xlane.xlu0 %966
  %968 = vadd.xlane.f32.xlu0 %v887
  %v969 = vpop.xlane.xlu0 %968
  %970 = vadd.xlane.f32.xlu0 %v888
  %v971 = vpop.xlane.xlu0 %970
  %972 = vadd.xlane.f32.xlu0 %v889
  %v973 = vpop.xlane.xlu0 %972
  %974 = vadd.xlane.f32.xlu0 %v890
  %v975 = vpop.xlane.xlu0 %974
  %976 = vadd.xlane.f32.xlu0 %v891
  %v977 = vpop.xlane.xlu0 %976
  %978 = vadd.xlane.f32.xlu0 %v892
  %v979 = vpop.xlane.xlu0 %978
  %980 = vadd.xlane.f32.xlu0 %v893
  %v981 = vpop.xlane.xlu0 %980
  %982 = vadd.xlane.f32.xlu0 %v894
  %v983 = vpop.xlane.xlu0 %982
  %984 = vadd.xlane.f32.xlu0 %v895
  %v985 = vpop.xlane.xlu0 %984
  %986 = vadd.xlane.f32.xlu0 %v896
  %v987 = vpop.xlane.xlu0 %986
  %988 = vadd.xlane.f32.xlu0 %v897
  %v989 = vpop.xlane.xlu0 %988
  %990 = vadd.xlane.f32.xlu0 %v898
  %v991 = vpop.xlane.xlu0 %990
  %992 = vadd.xlane.f32.xlu0 %v899
  %v993 = vpop.xlane.xlu0 %992
  %994 = vadd.xlane.f32.xlu0 %v900
  %v995 = vpop.xlane.xlu0 %994
  %996 = vadd.xlane.f32.xlu0 %v901
  %v997 = vpop.xlane.xlu0 %996
  %v1046 = vlaneseq
  %v1047 = vshrl.u32 %v1046, 7
  %v1048 = vsub.s32 %v38, %v1047
  %v1049 = vrot.slane %v903, %v1048
  %v1050 = vadd.s32 %v38, 4294967288
  %v1051 = vlaneseq
  %v1052 = vshrl.u32 %v1051, 7
  %v1053 = vsub.s32 %v1050, %v1052
  %v1054 = vrot.slane %v905, %v1053
  %vm1055 = vcmask 130112
  %v1056 = vsel %vm1055, %v1054, %v1049
  %v1057 = vlaneseq
  %v1058 = vshrl.u32 %v1057, 7
  %v1059 = vsub.s32 %v38, %v1058
  %v1060 = vrot.slane %v907, %v1059
  %v1061 = vlaneseq
  %v1062 = vshrl.u32 %v1061, 7
  %v1063 = vsub.s32 %v1050, %v1062
  %v1064 = vrot.slane %v909, %v1063
  %v1065 = vsel %vm1055, %v1064, %v1060
  %v1066 = vlaneseq
  %v1067 = vshrl.u32 %v1066, 7
  %v1068 = vsub.s32 %v38, %v1067
  %v1069 = vrot.slane %v911, %v1068
  %v1070 = vlaneseq
  %v1071 = vshrl.u32 %v1070, 7
  %v1072 = vsub.s32 %v1050, %v1071
  %v1073 = vrot.slane %v913, %v1072
  %v1074 = vsel %vm1055, %v1073, %v1069
  %v1075 = vlaneseq
  %v1076 = vshrl.u32 %v1075, 7
  %v1077 = vsub.s32 %v38, %v1076
  %v1078 = vrot.slane %v915, %v1077
  %v1079 = vlaneseq
  %v1080 = vshrl.u32 %v1079, 7
  %v1081 = vsub.s32 %v1050, %v1080
  %v1082 = vrot.slane %v917, %v1081
  %v1083 = vsel %vm1055, %v1082, %v1078
  %v1084 = vlaneseq
  %v1085 = vshrl.u32 %v1084, 7
  %v1086 = vsub.s32 %v38, %v1085
  %v1087 = vrot.slane %v919, %v1086
  %v1088 = vlaneseq
  %v1089 = vshrl.u32 %v1088, 7
  %v1090 = vsub.s32 %v1050, %v1089
  %v1091 = vrot.slane %v921, %v1090
  %v1092 = vsel %vm1055, %v1091, %v1087
  %v1093 = vlaneseq
  %v1094 = vshrl.u32 %v1093, 7
  %v1095 = vsub.s32 %v38, %v1094
  %v1096 = vrot.slane %v923, %v1095
  %v1097 = vlaneseq
  %v1098 = vshrl.u32 %v1097, 7
  %v1099 = vsub.s32 %v1050, %v1098
  %v1100 = vrot.slane %v925, %v1099
  %v1101 = vsel %vm1055, %v1100, %v1096
  %v1102 = vlaneseq
  %v1103 = vshrl.u32 %v1102, 7
  %v1104 = vsub.s32 %v38, %v1103
  %v1105 = vrot.slane %v927, %v1104
  %v1106 = vlaneseq
  %v1107 = vshrl.u32 %v1106, 7
  %v1108 = vsub.s32 %v1050, %v1107
  %v1109 = vrot.slane %v929, %v1108
  %v1110 = vsel %vm1055, %v1109, %v1105
  %v1111 = vlaneseq
  %v1112 = vshrl.u32 %v1111, 7
  %v1113 = vsub.s32 %v38, %v1112
  %v1114 = vrot.slane %v931, %v1113
  %v1115 = vlaneseq
  %v1116 = vshrl.u32 %v1115, 7
  %v1117 = vsub.s32 %v1050, %v1116
  %v1118 = vrot.slane %v933, %v1117
  %v1119 = vsel %vm1055, %v1118, %v1114
  %v1120 = vlaneseq
  %v1121 = vshrl.u32 %v1120, 7
  %v1122 = vsub.s32 %v38, %v1121
  %v1123 = vrot.slane %v935, %v1122
  %v1124 = vlaneseq
  %v1125 = vshrl.u32 %v1124, 7
  %v1126 = vsub.s32 %v1050, %v1125
  %v1127 = vrot.slane %v937, %v1126
  %v1128 = vsel %vm1055, %v1127, %v1123
  %v1129 = vlaneseq
  %v1130 = vshrl.u32 %v1129, 7
  %v1131 = vsub.s32 %v38, %v1130
  %v1132 = vrot.slane %v939, %v1131
  %v1133 = vlaneseq
  %v1134 = vshrl.u32 %v1133, 7
  %v1135 = vsub.s32 %v1050, %v1134
  %v1136 = vrot.slane %v941, %v1135
  %v1137 = vsel %vm1055, %v1136, %v1132
  %v1138 = vlaneseq
  %v1139 = vshrl.u32 %v1138, 7
  %v1140 = vsub.s32 %v38, %v1139
  %v1141 = vrot.slane %v943, %v1140
  %v1142 = vlaneseq
  %v1143 = vshrl.u32 %v1142, 7
  %v1144 = vsub.s32 %v1050, %v1143
  %v1145 = vrot.slane %v945, %v1144
  %v1146 = vsel %vm1055, %v1145, %v1141
  %v1147 = vlaneseq
  %v1148 = vshrl.u32 %v1147, 7
  %v1149 = vsub.s32 %v38, %v1148
  %v1150 = vrot.slane %v947, %v1149
  %v1151 = vlaneseq
  %v1152 = vshrl.u32 %v1151, 7
  %v1153 = vsub.s32 %v1050, %v1152
  %v1154 = vrot.slane %v949, %v1153
  %v1155 = vsel %vm1055, %v1154, %v1150
  %v1156 = vlaneseq
  %v1157 = vshrl.u32 %v1156, 7
  %v1158 = vsub.s32 %v38, %v1157
  %v1159 = vrot.slane %v951, %v1158
  %v1160 = vlaneseq
  %v1161 = vshrl.u32 %v1160, 7
  %v1162 = vsub.s32 %v1050, %v1161
  %v1163 = vrot.slane %v953, %v1162
  %v1164 = vsel %vm1055, %v1163, %v1159
  %v1165 = vlaneseq
  %v1166 = vshrl.u32 %v1165, 7
  %v1167 = vsub.s32 %v38, %v1166
  %v1168 = vrot.slane %v955, %v1167
  %v1169 = vlaneseq
  %v1170 = vshrl.u32 %v1169, 7
  %v1171 = vsub.s32 %v1050, %v1170
  %v1172 = vrot.slane %v957, %v1171
  %v1173 = vsel %vm1055, %v1172, %v1168
  %v1174 = vlaneseq
  %v1175 = vshrl.u32 %v1174, 7
  %v1176 = vsub.s32 %v38, %v1175
  %v1177 = vrot.slane %v959, %v1176
  %v1178 = vlaneseq
  %v1179 = vshrl.u32 %v1178, 7
  %v1180 = vsub.s32 %v1050, %v1179
  %v1181 = vrot.slane %v961, %v1180
  %v1182 = vsel %vm1055, %v1181, %v1177
  %v1183 = vlaneseq
  %v1184 = vshrl.u32 %v1183, 7
  %v1185 = vsub.s32 %v38, %v1184
  %v1186 = vrot.slane %v963, %v1185
  %v1187 = vlaneseq
  %v1188 = vshrl.u32 %v1187, 7
  %v1189 = vsub.s32 %v1050, %v1188
  %v1190 = vrot.slane %v965, %v1189
  %v1191 = vsel %vm1055, %v1190, %v1186
  %v1192 = vlaneseq
  %v1193 = vshrl.u32 %v1192, 7
  %v1194 = vsub.s32 %v38, %v1193
  %v1195 = vrot.slane %v967, %v1194
  %v1196 = vlaneseq
  %v1197 = vshrl.u32 %v1196, 7
  %v1198 = vsub.s32 %v1050, %v1197
  %v1199 = vrot.slane %v969, %v1198
  %v1200 = vsel %vm1055, %v1199, %v1195
  %v1201 = vlaneseq
  %v1202 = vshrl.u32 %v1201, 7
  %v1203 = vsub.s32 %v38, %v1202
  %v1204 = vrot.slane %v971, %v1203
  %v1205 = vlaneseq
  %v1206 = vshrl.u32 %v1205, 7
  %v1207 = vsub.s32 %v1050, %v1206
  %v1208 = vrot.slane %v973, %v1207
  %v1209 = vsel %vm1055, %v1208, %v1204
  %v1210 = vlaneseq
  %v1211 = vshrl.u32 %v1210, 7
  %v1212 = vsub.s32 %v38, %v1211
  %v1213 = vrot.slane %v975, %v1212
  %v1214 = vlaneseq
  %v1215 = vshrl.u32 %v1214, 7
  %v1216 = vsub.s32 %v1050, %v1215
  %v1217 = vrot.slane %v977, %v1216
  %v1218 = vsel %vm1055, %v1217, %v1213
  %v1219 = vlaneseq
  %v1220 = vshrl.u32 %v1219, 7
  %v1221 = vsub.s32 %v38, %v1220
  %v1222 = vrot.slane %v979, %v1221
  %v1223 = vlaneseq
  %v1224 = vshrl.u32 %v1223, 7
  %v1225 = vsub.s32 %v1050, %v1224
  %v1226 = vrot.slane %v981, %v1225
  %v1227 = vsel %vm1055, %v1226, %v1222
  %v1228 = vlaneseq
  %v1229 = vshrl.u32 %v1228, 7
  %v1230 = vsub.s32 %v38, %v1229
  %v1231 = vrot.slane %v983, %v1230
  %v1232 = vlaneseq
  %v1233 = vshrl.u32 %v1232, 7
  %v1234 = vsub.s32 %v1050, %v1233
  %v1235 = vrot.slane %v985, %v1234
  %v1236 = vsel %vm1055, %v1235, %v1231
  %v1237 = vlaneseq
  %v1238 = vshrl.u32 %v1237, 7
  %v1239 = vsub.s32 %v38, %v1238
  %v1240 = vrot.slane %v987, %v1239
  %v1241 = vlaneseq
  %v1242 = vshrl.u32 %v1241, 7
  %v1243 = vsub.s32 %v1050, %v1242
  %v1244 = vrot.slane %v989, %v1243
  %v1245 = vsel %vm1055, %v1244, %v1240
  %v1246 = vlaneseq
  %v1247 = vshrl.u32 %v1246, 7
  %v1248 = vsub.s32 %v38, %v1247
  %v1249 = vrot.slane %v991, %v1248
  %v1250 = vlaneseq
  %v1251 = vshrl.u32 %v1250, 7
  %v1252 = vsub.s32 %v1050, %v1251
  %v1253 = vrot.slane %v993, %v1252
  %v1254 = vsel %vm1055, %v1253, %v1249
  %v1255 = vlaneseq
  %v1256 = vshrl.u32 %v1255, 7
  %v1257 = vsub.s32 %v38, %v1256
  %v1258 = vrot.slane %v995, %v1257
  %v1259 = vlaneseq
  %v1260 = vshrl.u32 %v1259, 7
  %v1261 = vsub.s32 %v1050, %v1260
  %v1262 = vrot.slane %v997, %v1261
  %v1263 = vsel %vm1055, %v1262, %v1258
  %vm1264 = vcmask 1041409
  %v1265 = vsel %vm1264, %v1065, %v1056
  %vm1266 = vcmask 1042434
  %v1267 = vsel %vm1266, %v1074, %v1265
  %vm1268 = vcmask 1043459
  %v1269 = vsel %vm1268, %v1083, %v1267
  %vm1270 = vcmask 1044484
  %v1271 = vsel %vm1270, %v1092, %v1269
  %vm1272 = vcmask 1045509
  %v1273 = vsel %vm1272, %v1101, %v1271
  %vm1274 = vcmask 1046534
  %v1275 = vsel %vm1274, %v1110, %v1273
  %vm1276 = vcmask 1047559
  %v1277 = vsel %vm1276, %v1119, %v1275
  %v1278 = vsel %vm1264, %v1137, %v1128
  %v1279 = vsel %vm1266, %v1146, %v1278
  %v1280 = vsel %vm1268, %v1155, %v1279
  %v1281 = vsel %vm1270, %v1164, %v1280
  %v1282 = vsel %vm1272, %v1173, %v1281
  %v1283 = vsel %vm1274, %v1182, %v1282
  %v1284 = vsel %vm1276, %v1191, %v1283
  %v1285 = vsel %vm1264, %v1209, %v1200
  %v1286 = vsel %vm1266, %v1218, %v1285
  %v1287 = vsel %vm1268, %v1227, %v1286
  %v1288 = vsel %vm1270, %v1236, %v1287
  %v1289 = vsel %vm1272, %v1245, %v1288
  %v1290 = vsel %vm1274, %v1254, %v1289
  %v1291 = vsel %vm1276, %v1263, %v1290
  %vm1295 = vcmask 130048
  %v1296 = vsel %vm1295, %v1277, -inf
  %1297 = vmax.xlane.f32.xlu0 %v1296
  %v1298 = vpop.xlane.xlu0 %1297
  %v1299 = vsel %vm1295, %v1284, -inf
  %1300 = vmax.xlane.f32.xlu0 %v1299
  %v1301 = vpop.xlane.xlu0 %1300
  %v1302 = vsel %vm1295, %v1291, -inf
  %1303 = vmax.xlane.f32.xlu0 %v1302
  %v1304 = vpop.xlane.xlu0 %1303
  %v1308 = vlaneseq
  %v1309 = vshrl.u32 %v1308, 7
  %v1310 = vsub.s32 0, %v1309
  %v1311 = vrot.slane %v1298, %v1310
  %v1312 = vlaneseq
  %v1313 = vshrl.u32 %v1312, 7
  %v1314 = vsub.s32 1, %v1313
  %v1315 = vrot.slane %v1298, %v1314
  %v1316 = vlaneseq
  %v1317 = vshrl.u32 %v1316, 7
  %v1318 = vsub.s32 2, %v1317
  %v1319 = vrot.slane %v1298, %v1318
  %v1320 = vlaneseq
  %v1321 = vshrl.u32 %v1320, 7
  %v1322 = vsub.s32 3, %v1321
  %v1323 = vrot.slane %v1298, %v1322
  %v1324 = vlaneseq
  %v1325 = vshrl.u32 %v1324, 7
  %v1326 = vsub.s32 4, %v1325
  %v1327 = vrot.slane %v1298, %v1326
  %v1328 = vlaneseq
  %v1329 = vshrl.u32 %v1328, 7
  %v1330 = vsub.s32 5, %v1329
  %v1331 = vrot.slane %v1298, %v1330
  %v1332 = vlaneseq
  %v1333 = vshrl.u32 %v1332, 7
  %v1334 = vsub.s32 6, %v1333
  %v1335 = vrot.slane %v1298, %v1334
  %v1336 = vlaneseq
  %v1337 = vshrl.u32 %v1336, 7
  %v1338 = vsub.s32 7, %v1337
  %v1339 = vrot.slane %v1298, %v1338
  %v1340 = vlaneseq
  %v1341 = vshrl.u32 %v1340, 7
  %v1342 = vsub.s32 0, %v1341
  %v1343 = vrot.slane %v1301, %v1342
  %v1344 = vlaneseq
  %v1345 = vshrl.u32 %v1344, 7
  %v1346 = vsub.s32 1, %v1345
  %v1347 = vrot.slane %v1301, %v1346
  %v1348 = vlaneseq
  %v1349 = vshrl.u32 %v1348, 7
  %v1350 = vsub.s32 2, %v1349
  %v1351 = vrot.slane %v1301, %v1350
  %v1352 = vlaneseq
  %v1353 = vshrl.u32 %v1352, 7
  %v1354 = vsub.s32 3, %v1353
  %v1355 = vrot.slane %v1301, %v1354
  %v1356 = vlaneseq
  %v1357 = vshrl.u32 %v1356, 7
  %v1358 = vsub.s32 4, %v1357
  %v1359 = vrot.slane %v1301, %v1358
  %v1360 = vlaneseq
  %v1361 = vshrl.u32 %v1360, 7
  %v1362 = vsub.s32 5, %v1361
  %v1363 = vrot.slane %v1301, %v1362
  %v1364 = vlaneseq
  %v1365 = vshrl.u32 %v1364, 7
  %v1366 = vsub.s32 6, %v1365
  %v1367 = vrot.slane %v1301, %v1366
  %v1368 = vlaneseq
  %v1369 = vshrl.u32 %v1368, 7
  %v1370 = vsub.s32 7, %v1369
  %v1371 = vrot.slane %v1301, %v1370
  %v1372 = vlaneseq
  %v1373 = vshrl.u32 %v1372, 7
  %v1374 = vsub.s32 0, %v1373
  %v1375 = vrot.slane %v1304, %v1374
  %v1376 = vlaneseq
  %v1377 = vshrl.u32 %v1376, 7
  %v1378 = vsub.s32 1, %v1377
  %v1379 = vrot.slane %v1304, %v1378
  %v1380 = vlaneseq
  %v1381 = vshrl.u32 %v1380, 7
  %v1382 = vsub.s32 2, %v1381
  %v1383 = vrot.slane %v1304, %v1382
  %v1384 = vlaneseq
  %v1385 = vshrl.u32 %v1384, 7
  %v1386 = vsub.s32 3, %v1385
  %v1387 = vrot.slane %v1304, %v1386
  %v1388 = vlaneseq
  %v1389 = vshrl.u32 %v1388, 7
  %v1390 = vsub.s32 4, %v1389
  %v1391 = vrot.slane %v1304, %v1390
  %v1392 = vlaneseq
  %v1393 = vshrl.u32 %v1392, 7
  %v1394 = vsub.s32 5, %v1393
  %v1395 = vrot.slane %v1304, %v1394
  %v1396 = vlaneseq
  %v1397 = vshrl.u32 %v1396, 7
  %v1398 = vsub.s32 6, %v1397
  %v1399 = vrot.slane %v1304, %v1398
  %v1400 = vlaneseq
  %v1401 = vshrl.u32 %v1400, 7
  %v1402 = vsub.s32 7, %v1401
  %v1403 = vrot.slane %v1304, %v1402
  %v1428 = vsub.f32 %v903, %v1311
  %v1429 = vsub.f32 %v905, %v1311
  %v1430 = vsub.f32 %v907, %v1315
  %v1431 = vsub.f32 %v909, %v1315
  %v1432 = vsub.f32 %v911, %v1319
  %v1433 = vsub.f32 %v913, %v1319
  %v1434 = vsub.f32 %v915, %v1323
  %v1435 = vsub.f32 %v917, %v1323
  %v1436 = vsub.f32 %v919, %v1327
  %v1437 = vsub.f32 %v921, %v1327
  %v1438 = vsub.f32 %v923, %v1331
  %v1439 = vsub.f32 %v925, %v1331
  %v1440 = vsub.f32 %v927, %v1335
  %v1441 = vsub.f32 %v929, %v1335
  %v1442 = vsub.f32 %v931, %v1339
  %v1443 = vsub.f32 %v933, %v1339
  %v1444 = vsub.f32 %v935, %v1343
  %v1445 = vsub.f32 %v937, %v1343
  %v1446 = vsub.f32 %v939, %v1347
  %v1447 = vsub.f32 %v941, %v1347
  %v1448 = vsub.f32 %v943, %v1351
  %v1449 = vsub.f32 %v945, %v1351
  %v1450 = vsub.f32 %v947, %v1355
  %v1451 = vsub.f32 %v949, %v1355
  %v1452 = vsub.f32 %v951, %v1359
  %v1453 = vsub.f32 %v953, %v1359
  %v1454 = vsub.f32 %v955, %v1363
  %v1455 = vsub.f32 %v957, %v1363
  %v1456 = vsub.f32 %v959, %v1367
  %v1457 = vsub.f32 %v961, %v1367
  %v1458 = vsub.f32 %v963, %v1371
  %v1459 = vsub.f32 %v965, %v1371
  %v1460 = vsub.f32 %v967, %v1375
  %v1461 = vsub.f32 %v969, %v1375
  %v1462 = vsub.f32 %v971, %v1379
  %v1463 = vsub.f32 %v973, %v1379
  %v1464 = vsub.f32 %v975, %v1383
  %v1465 = vsub.f32 %v977, %v1383
  %v1466 = vsub.f32 %v979, %v1387
  %v1467 = vsub.f32 %v981, %v1387
  %v1468 = vsub.f32 %v983, %v1391
  %v1469 = vsub.f32 %v985, %v1391
  %v1470 = vsub.f32 %v987, %v1395
  %v1471 = vsub.f32 %v989, %v1395
  %v1472 = vsub.f32 %v991, %v1399
  %v1473 = vsub.f32 %v993, %v1399
  %v1474 = vsub.f32 %v995, %v1403
  %v1475 = vsub.f32 %v997, %v1403
  %v1476 = vmul.f32 %v1428, 1.442695
  %v1477 = vpow.pop %v1476
  %v1478 = vmul.f32 %v1429, 1.442695
  %v1479 = vpow.pop %v1478
  %v1480 = vmul.f32 %v1430, 1.442695
  %v1481 = vpow.pop %v1480
  %v1482 = vmul.f32 %v1431, 1.442695
  %v1483 = vpow.pop %v1482
  %v1484 = vmul.f32 %v1432, 1.442695
  %v1485 = vpow.pop %v1484
  %v1486 = vmul.f32 %v1433, 1.442695
  %v1487 = vpow.pop %v1486
  %v1488 = vmul.f32 %v1434, 1.442695
  %v1489 = vpow.pop %v1488
  %v1490 = vmul.f32 %v1435, 1.442695
  %v1491 = vpow.pop %v1490
  %v1492 = vmul.f32 %v1436, 1.442695
  %v1493 = vpow.pop %v1492
  %v1494 = vmul.f32 %v1437, 1.442695
  %v1495 = vpow.pop %v1494
  %v1496 = vmul.f32 %v1438, 1.442695
  %v1497 = vpow.pop %v1496
  %v1498 = vmul.f32 %v1439, 1.442695
  %v1499 = vpow.pop %v1498
  %v1500 = vmul.f32 %v1440, 1.442695
  %v1501 = vpow.pop %v1500
  %v1502 = vmul.f32 %v1441, 1.442695
  %v1503 = vpow.pop %v1502
  %v1504 = vmul.f32 %v1442, 1.442695
  %v1505 = vpow.pop %v1504
  %v1506 = vmul.f32 %v1443, 1.442695
  %v1507 = vpow.pop %v1506
  %v1508 = vmul.f32 %v1444, 1.442695
  %v1509 = vpow.pop %v1508
  %v1510 = vmul.f32 %v1445, 1.442695
  %v1511 = vpow.pop %v1510
  %v1512 = vmul.f32 %v1446, 1.442695
  %v1513 = vpow.pop %v1512
  %v1514 = vmul.f32 %v1447, 1.442695
  %v1515 = vpow.pop %v1514
  %v1516 = vmul.f32 %v1448, 1.442695
  %v1517 = vpow.pop %v1516
  %v1518 = vmul.f32 %v1449, 1.442695
  %v1519 = vpow.pop %v1518
  %v1520 = vmul.f32 %v1450, 1.442695
  %v1521 = vpow.pop %v1520
  %v1522 = vmul.f32 %v1451, 1.442695
  %v1523 = vpow.pop %v1522
  %v1524 = vmul.f32 %v1452, 1.442695
  %v1525 = vpow.pop %v1524
  %v1526 = vmul.f32 %v1453, 1.442695
  %v1527 = vpow.pop %v1526
  %v1528 = vmul.f32 %v1454, 1.442695
  %v1529 = vpow.pop %v1528
  %v1530 = vmul.f32 %v1455, 1.442695
  %v1531 = vpow.pop %v1530
  %v1532 = vmul.f32 %v1456, 1.442695
  %v1533 = vpow.pop %v1532
  %v1534 = vmul.f32 %v1457, 1.442695
  %v1535 = vpow.pop %v1534
  %v1536 = vmul.f32 %v1458, 1.442695
  %v1537 = vpow.pop %v1536
  %v1538 = vmul.f32 %v1459, 1.442695
  %v1539 = vpow.pop %v1538
  %v1540 = vmul.f32 %v1460, 1.442695
  %v1541 = vpow.pop %v1540
  %v1542 = vmul.f32 %v1461, 1.442695
  %v1543 = vpow.pop %v1542
  %v1544 = vmul.f32 %v1462, 1.442695
  %v1545 = vpow.pop %v1544
  %v1546 = vmul.f32 %v1463, 1.442695
  %v1547 = vpow.pop %v1546
  %v1548 = vmul.f32 %v1464, 1.442695
  %v1549 = vpow.pop %v1548
  %v1550 = vmul.f32 %v1465, 1.442695
  %v1551 = vpow.pop %v1550
  %v1552 = vmul.f32 %v1466, 1.442695
  %v1553 = vpow.pop %v1552
  %v1554 = vmul.f32 %v1467, 1.442695
  %v1555 = vpow.pop %v1554
  %v1556 = vmul.f32 %v1468, 1.442695
  %v1557 = vpow.pop %v1556
  %v1558 = vmul.f32 %v1469, 1.442695
  %v1559 = vpow.pop %v1558
  %v1560 = vmul.f32 %v1470, 1.442695
  %v1561 = vpow.pop %v1560
  %v1562 = vmul.f32 %v1471, 1.442695
  %v1563 = vpow.pop %v1562
  %v1564 = vmul.f32 %v1472, 1.442695
  %v1565 = vpow.pop %v1564
  %v1566 = vmul.f32 %v1473, 1.442695
  %v1567 = vpow.pop %v1566
  %v1568 = vmul.f32 %v1474, 1.442695
  %v1569 = vpow.pop %v1568
  %v1570 = vmul.f32 %v1475, 1.442695
  %v1571 = vpow.pop %v1570
  %1620 = vset.pattern.permute.xlu0 0
  %1621 = vperm.xlu0 %1620, %v1477
  %v1622 = vpop.permute.xlu0 %1621
  %1623 = vset.pattern.permute.xlu0 0
  %1624 = vperm.xlu0 %1623, %v1479
  %v1625 = vpop.permute.xlu0 %1624
  %1626 = vset.pattern.permute.xlu0 0
  %1627 = vperm.xlu0 %1626, %v1481
  %v1628 = vpop.permute.xlu0 %1627
  %1629 = vset.pattern.permute.xlu0 0
  %1630 = vperm.xlu0 %1629, %v1483
  %v1631 = vpop.permute.xlu0 %1630
  %1632 = vset.pattern.permute.xlu0 0
  %1633 = vperm.xlu0 %1632, %v1485
  %v1634 = vpop.permute.xlu0 %1633
  %1635 = vset.pattern.permute.xlu0 0
  %1636 = vperm.xlu0 %1635, %v1487
  %v1637 = vpop.permute.xlu0 %1636
  %1638 = vset.pattern.permute.xlu0 0
  %1639 = vperm.xlu0 %1638, %v1489
  %v1640 = vpop.permute.xlu0 %1639
  %1641 = vset.pattern.permute.xlu0 0
  %1642 = vperm.xlu0 %1641, %v1491
  %v1643 = vpop.permute.xlu0 %1642
  %1644 = vset.pattern.permute.xlu0 0
  %1645 = vperm.xlu0 %1644, %v1493
  %v1646 = vpop.permute.xlu0 %1645
  %1647 = vset.pattern.permute.xlu0 0
  %1648 = vperm.xlu0 %1647, %v1495
  %v1649 = vpop.permute.xlu0 %1648
  %1650 = vset.pattern.permute.xlu0 0
  %1651 = vperm.xlu0 %1650, %v1497
  %v1652 = vpop.permute.xlu0 %1651
  %1653 = vset.pattern.permute.xlu0 0
  %1654 = vperm.xlu0 %1653, %v1499
  %v1655 = vpop.permute.xlu0 %1654
  %1656 = vset.pattern.permute.xlu0 0
  %1657 = vperm.xlu0 %1656, %v1501
  %v1658 = vpop.permute.xlu0 %1657
  %1659 = vset.pattern.permute.xlu0 0
  %1660 = vperm.xlu0 %1659, %v1503
  %v1661 = vpop.permute.xlu0 %1660
  %1662 = vset.pattern.permute.xlu0 0
  %1663 = vperm.xlu0 %1662, %v1505
  %v1664 = vpop.permute.xlu0 %1663
  %1665 = vset.pattern.permute.xlu0 0
  %1666 = vperm.xlu0 %1665, %v1507
  %v1667 = vpop.permute.xlu0 %1666
  %1668 = vset.pattern.permute.xlu0 0
  %1669 = vperm.xlu0 %1668, %v1509
  %v1670 = vpop.permute.xlu0 %1669
  %1671 = vset.pattern.permute.xlu0 0
  %1672 = vperm.xlu0 %1671, %v1511
  %v1673 = vpop.permute.xlu0 %1672
  %1674 = vset.pattern.permute.xlu0 0
  %1675 = vperm.xlu0 %1674, %v1513
  %v1676 = vpop.permute.xlu0 %1675
  %1677 = vset.pattern.permute.xlu0 0
  %1678 = vperm.xlu0 %1677, %v1515
  %v1679 = vpop.permute.xlu0 %1678
  %1680 = vset.pattern.permute.xlu0 0
  %1681 = vperm.xlu0 %1680, %v1517
  %v1682 = vpop.permute.xlu0 %1681
  %1683 = vset.pattern.permute.xlu0 0
  %1684 = vperm.xlu0 %1683, %v1519
  %v1685 = vpop.permute.xlu0 %1684
  %1686 = vset.pattern.permute.xlu0 0
  %1687 = vperm.xlu0 %1686, %v1521
  %v1688 = vpop.permute.xlu0 %1687
  %1689 = vset.pattern.permute.xlu0 0
  %1690 = vperm.xlu0 %1689, %v1523
  %v1691 = vpop.permute.xlu0 %1690
  %1692 = vset.pattern.permute.xlu0 0
  %1693 = vperm.xlu0 %1692, %v1525
  %v1694 = vpop.permute.xlu0 %1693
  %1695 = vset.pattern.permute.xlu0 0
  %1696 = vperm.xlu0 %1695, %v1527
  %v1697 = vpop.permute.xlu0 %1696
  %1698 = vset.pattern.permute.xlu0 0
  %1699 = vperm.xlu0 %1698, %v1529
  %v1700 = vpop.permute.xlu0 %1699
  %1701 = vset.pattern.permute.xlu0 0
  %1702 = vperm.xlu0 %1701, %v1531
  %v1703 = vpop.permute.xlu0 %1702
  %1704 = vset.pattern.permute.xlu0 0
  %1705 = vperm.xlu0 %1704, %v1533
  %v1706 = vpop.permute.xlu0 %1705
  %1707 = vset.pattern.permute.xlu0 0
  %1708 = vperm.xlu0 %1707, %v1535
  %v1709 = vpop.permute.xlu0 %1708
  %1710 = vset.pattern.permute.xlu0 0
  %1711 = vperm.xlu0 %1710, %v1537
  %v1712 = vpop.permute.xlu0 %1711
  %1713 = vset.pattern.permute.xlu0 0
  %1714 = vperm.xlu0 %1713, %v1539
  %v1715 = vpop.permute.xlu0 %1714
  %1716 = vset.pattern.permute.xlu0 0
  %1717 = vperm.xlu0 %1716, %v1541
  %v1718 = vpop.permute.xlu0 %1717
  %1719 = vset.pattern.permute.xlu0 0
  %1720 = vperm.xlu0 %1719, %v1543
  %v1721 = vpop.permute.xlu0 %1720
  %1722 = vset.pattern.permute.xlu0 0
  %1723 = vperm.xlu0 %1722, %v1545
  %v1724 = vpop.permute.xlu0 %1723
  %1725 = vset.pattern.permute.xlu0 0
  %1726 = vperm.xlu0 %1725, %v1547
  %v1727 = vpop.permute.xlu0 %1726
  %1728 = vset.pattern.permute.xlu0 0
  %1729 = vperm.xlu0 %1728, %v1549
  %v1730 = vpop.permute.xlu0 %1729
  %1731 = vset.pattern.permute.xlu0 0
  %1732 = vperm.xlu0 %1731, %v1551
  %v1733 = vpop.permute.xlu0 %1732
  %1734 = vset.pattern.permute.xlu0 0
  %1735 = vperm.xlu0 %1734, %v1553
  %v1736 = vpop.permute.xlu0 %1735
  %1737 = vset.pattern.permute.xlu0 0
  %1738 = vperm.xlu0 %1737, %v1555
  %v1739 = vpop.permute.xlu0 %1738
  %1740 = vset.pattern.permute.xlu0 0
  %1741 = vperm.xlu0 %1740, %v1557
  %v1742 = vpop.permute.xlu0 %1741
  %1743 = vset.pattern.permute.xlu0 0
  %1744 = vperm.xlu0 %1743, %v1559
  %v1745 = vpop.permute.xlu0 %1744
  %1746 = vset.pattern.permute.xlu0 0
  %1747 = vperm.xlu0 %1746, %v1561
  %v1748 = vpop.permute.xlu0 %1747
  %1749 = vset.pattern.permute.xlu0 0
  %1750 = vperm.xlu0 %1749, %v1563
  %v1751 = vpop.permute.xlu0 %1750
  %1752 = vset.pattern.permute.xlu0 0
  %1753 = vperm.xlu0 %1752, %v1565
  %v1754 = vpop.permute.xlu0 %1753
  %1755 = vset.pattern.permute.xlu0 0
  %1756 = vperm.xlu0 %1755, %v1567
  %v1757 = vpop.permute.xlu0 %1756
  %1758 = vset.pattern.permute.xlu0 0
  %1759 = vperm.xlu0 %1758, %v1569
  %v1760 = vpop.permute.xlu0 %1759
  %1761 = vset.pattern.permute.xlu0 0
  %1762 = vperm.xlu0 %1761, %v1571
  %v1763 = vpop.permute.xlu0 %1762
  %v1764 = vlaneseq
  %v1765 = vshrl.u32 %v1764, 7
  %v1766 = vsub.s32 %v38, %v1765
  %v1767 = vrot.slane %v1622, %v1766
  %v1768 = vlaneseq
  %v1769 = vshrl.u32 %v1768, 7
  %v1770 = vsub.s32 %v1050, %v1769
  %v1771 = vrot.slane %v1625, %v1770
  %v1772 = vsel %vm1055, %v1771, %v1767
  %v1773 = vlaneseq
  %v1774 = vshrl.u32 %v1773, 7
  %v1775 = vsub.s32 %v38, %v1774
  %v1776 = vrot.slane %v1628, %v1775
  %v1777 = vlaneseq
  %v1778 = vshrl.u32 %v1777, 7
  %v1779 = vsub.s32 %v1050, %v1778
  %v1780 = vrot.slane %v1631, %v1779
  %v1781 = vsel %vm1055, %v1780, %v1776
  %v1782 = vlaneseq
  %v1783 = vshrl.u32 %v1782, 7
  %v1784 = vsub.s32 %v38, %v1783
  %v1785 = vrot.slane %v1634, %v1784
  %v1786 = vlaneseq
  %v1787 = vshrl.u32 %v1786, 7
  %v1788 = vsub.s32 %v1050, %v1787
  %v1789 = vrot.slane %v1637, %v1788
  %v1790 = vsel %vm1055, %v1789, %v1785
  %v1791 = vlaneseq
  %v1792 = vshrl.u32 %v1791, 7
  %v1793 = vsub.s32 %v38, %v1792
  %v1794 = vrot.slane %v1640, %v1793
  %v1795 = vlaneseq
  %v1796 = vshrl.u32 %v1795, 7
  %v1797 = vsub.s32 %v1050, %v1796
  %v1798 = vrot.slane %v1643, %v1797
  %v1799 = vsel %vm1055, %v1798, %v1794
  %v1800 = vlaneseq
  %v1801 = vshrl.u32 %v1800, 7
  %v1802 = vsub.s32 %v38, %v1801
  %v1803 = vrot.slane %v1646, %v1802
  %v1804 = vlaneseq
  %v1805 = vshrl.u32 %v1804, 7
  %v1806 = vsub.s32 %v1050, %v1805
  %v1807 = vrot.slane %v1649, %v1806
  %v1808 = vsel %vm1055, %v1807, %v1803
  %v1809 = vlaneseq
  %v1810 = vshrl.u32 %v1809, 7
  %v1811 = vsub.s32 %v38, %v1810
  %v1812 = vrot.slane %v1652, %v1811
  %v1813 = vlaneseq
  %v1814 = vshrl.u32 %v1813, 7
  %v1815 = vsub.s32 %v1050, %v1814
  %v1816 = vrot.slane %v1655, %v1815
  %v1817 = vsel %vm1055, %v1816, %v1812
  %v1818 = vlaneseq
  %v1819 = vshrl.u32 %v1818, 7
  %v1820 = vsub.s32 %v38, %v1819
  %v1821 = vrot.slane %v1658, %v1820
  %v1822 = vlaneseq
  %v1823 = vshrl.u32 %v1822, 7
  %v1824 = vsub.s32 %v1050, %v1823
  %v1825 = vrot.slane %v1661, %v1824
  %v1826 = vsel %vm1055, %v1825, %v1821
  %v1827 = vlaneseq
  %v1828 = vshrl.u32 %v1827, 7
  %v1829 = vsub.s32 %v38, %v1828
  %v1830 = vrot.slane %v1664, %v1829
  %v1831 = vlaneseq
  %v1832 = vshrl.u32 %v1831, 7
  %v1833 = vsub.s32 %v1050, %v1832
  %v1834 = vrot.slane %v1667, %v1833
  %v1835 = vsel %vm1055, %v1834, %v1830
  %v1836 = vlaneseq
  %v1837 = vshrl.u32 %v1836, 7
  %v1838 = vsub.s32 %v38, %v1837
  %v1839 = vrot.slane %v1670, %v1838
  %v1840 = vlaneseq
  %v1841 = vshrl.u32 %v1840, 7
  %v1842 = vsub.s32 %v1050, %v1841
  %v1843 = vrot.slane %v1673, %v1842
  %v1844 = vsel %vm1055, %v1843, %v1839
  %v1845 = vlaneseq
  %v1846 = vshrl.u32 %v1845, 7
  %v1847 = vsub.s32 %v38, %v1846
  %v1848 = vrot.slane %v1676, %v1847
  %v1849 = vlaneseq
  %v1850 = vshrl.u32 %v1849, 7
  %v1851 = vsub.s32 %v1050, %v1850
  %v1852 = vrot.slane %v1679, %v1851
  %v1853 = vsel %vm1055, %v1852, %v1848
  %v1854 = vlaneseq
  %v1855 = vshrl.u32 %v1854, 7
  %v1856 = vsub.s32 %v38, %v1855
  %v1857 = vrot.slane %v1682, %v1856
  %v1858 = vlaneseq
  %v1859 = vshrl.u32 %v1858, 7
  %v1860 = vsub.s32 %v1050, %v1859
  %v1861 = vrot.slane %v1685, %v1860
  %v1862 = vsel %vm1055, %v1861, %v1857
  %v1863 = vlaneseq
  %v1864 = vshrl.u32 %v1863, 7
  %v1865 = vsub.s32 %v38, %v1864
  %v1866 = vrot.slane %v1688, %v1865
  %v1867 = vlaneseq
  %v1868 = vshrl.u32 %v1867, 7
  %v1869 = vsub.s32 %v1050, %v1868
  %v1870 = vrot.slane %v1691, %v1869
  %v1871 = vsel %vm1055, %v1870, %v1866
  %v1872 = vlaneseq
  %v1873 = vshrl.u32 %v1872, 7
  %v1874 = vsub.s32 %v38, %v1873
  %v1875 = vrot.slane %v1694, %v1874
  %v1876 = vlaneseq
  %v1877 = vshrl.u32 %v1876, 7
  %v1878 = vsub.s32 %v1050, %v1877
  %v1879 = vrot.slane %v1697, %v1878
  %v1880 = vsel %vm1055, %v1879, %v1875
  %v1881 = vlaneseq
  %v1882 = vshrl.u32 %v1881, 7
  %v1883 = vsub.s32 %v38, %v1882
  %v1884 = vrot.slane %v1700, %v1883
  %v1885 = vlaneseq
  %v1886 = vshrl.u32 %v1885, 7
  %v1887 = vsub.s32 %v1050, %v1886
  %v1888 = vrot.slane %v1703, %v1887
  %v1889 = vsel %vm1055, %v1888, %v1884
  %v1890 = vlaneseq
  %v1891 = vshrl.u32 %v1890, 7
  %v1892 = vsub.s32 %v38, %v1891
  %v1893 = vrot.slane %v1706, %v1892
  %v1894 = vlaneseq
  %v1895 = vshrl.u32 %v1894, 7
  %v1896 = vsub.s32 %v1050, %v1895
  %v1897 = vrot.slane %v1709, %v1896
  %v1898 = vsel %vm1055, %v1897, %v1893
  %v1899 = vlaneseq
  %v1900 = vshrl.u32 %v1899, 7
  %v1901 = vsub.s32 %v38, %v1900
  %v1902 = vrot.slane %v1712, %v1901
  %v1903 = vlaneseq
  %v1904 = vshrl.u32 %v1903, 7
  %v1905 = vsub.s32 %v1050, %v1904
  %v1906 = vrot.slane %v1715, %v1905
  %v1907 = vsel %vm1055, %v1906, %v1902
  %v1908 = vlaneseq
  %v1909 = vshrl.u32 %v1908, 7
  %v1910 = vsub.s32 %v38, %v1909
  %v1911 = vrot.slane %v1718, %v1910
  %v1912 = vlaneseq
  %v1913 = vshrl.u32 %v1912, 7
  %v1914 = vsub.s32 %v1050, %v1913
  %v1915 = vrot.slane %v1721, %v1914
  %v1916 = vsel %vm1055, %v1915, %v1911
  %v1917 = vlaneseq
  %v1918 = vshrl.u32 %v1917, 7
  %v1919 = vsub.s32 %v38, %v1918
  %v1920 = vrot.slane %v1724, %v1919
  %v1921 = vlaneseq
  %v1922 = vshrl.u32 %v1921, 7
  %v1923 = vsub.s32 %v1050, %v1922
  %v1924 = vrot.slane %v1727, %v1923
  %v1925 = vsel %vm1055, %v1924, %v1920
  %v1926 = vlaneseq
  %v1927 = vshrl.u32 %v1926, 7
  %v1928 = vsub.s32 %v38, %v1927
  %v1929 = vrot.slane %v1730, %v1928
  %v1930 = vlaneseq
  %v1931 = vshrl.u32 %v1930, 7
  %v1932 = vsub.s32 %v1050, %v1931
  %v1933 = vrot.slane %v1733, %v1932
  %v1934 = vsel %vm1055, %v1933, %v1929
  %v1935 = vlaneseq
  %v1936 = vshrl.u32 %v1935, 7
  %v1937 = vsub.s32 %v38, %v1936
  %v1938 = vrot.slane %v1736, %v1937
  %v1939 = vlaneseq
  %v1940 = vshrl.u32 %v1939, 7
  %v1941 = vsub.s32 %v1050, %v1940
  %v1942 = vrot.slane %v1739, %v1941
  %v1943 = vsel %vm1055, %v1942, %v1938
  %v1944 = vlaneseq
  %v1945 = vshrl.u32 %v1944, 7
  %v1946 = vsub.s32 %v38, %v1945
  %v1947 = vrot.slane %v1742, %v1946
  %v1948 = vlaneseq
  %v1949 = vshrl.u32 %v1948, 7
  %v1950 = vsub.s32 %v1050, %v1949
  %v1951 = vrot.slane %v1745, %v1950
  %v1952 = vsel %vm1055, %v1951, %v1947
  %v1953 = vlaneseq
  %v1954 = vshrl.u32 %v1953, 7
  %v1955 = vsub.s32 %v38, %v1954
  %v1956 = vrot.slane %v1748, %v1955
  %v1957 = vlaneseq
  %v1958 = vshrl.u32 %v1957, 7
  %v1959 = vsub.s32 %v1050, %v1958
  %v1960 = vrot.slane %v1751, %v1959
  %v1961 = vsel %vm1055, %v1960, %v1956
  %v1962 = vlaneseq
  %v1963 = vshrl.u32 %v1962, 7
  %v1964 = vsub.s32 %v38, %v1963
  %v1965 = vrot.slane %v1754, %v1964
  %v1966 = vlaneseq
  %v1967 = vshrl.u32 %v1966, 7
  %v1968 = vsub.s32 %v1050, %v1967
  %v1969 = vrot.slane %v1757, %v1968
  %v1970 = vsel %vm1055, %v1969, %v1965
  %v1971 = vlaneseq
  %v1972 = vshrl.u32 %v1971, 7
  %v1973 = vsub.s32 %v38, %v1972
  %v1974 = vrot.slane %v1760, %v1973
  %v1975 = vlaneseq
  %v1976 = vshrl.u32 %v1975, 7
  %v1977 = vsub.s32 %v1050, %v1976
  %v1978 = vrot.slane %v1763, %v1977
  %v1979 = vsel %vm1055, %v1978, %v1974
  %v1980 = vsel %vm1264, %v1781, %v1772
  %v1981 = vsel %vm1266, %v1790, %v1980
  %v1982 = vsel %vm1268, %v1799, %v1981
  %v1983 = vsel %vm1270, %v1808, %v1982
  %v1984 = vsel %vm1272, %v1817, %v1983
  %v1985 = vsel %vm1274, %v1826, %v1984
  %v1986 = vsel %vm1276, %v1835, %v1985
  %v1987 = vsel %vm1264, %v1853, %v1844
  %v1988 = vsel %vm1266, %v1862, %v1987
  %v1989 = vsel %vm1268, %v1871, %v1988
  %v1990 = vsel %vm1270, %v1880, %v1989
  %v1991 = vsel %vm1272, %v1889, %v1990
  %v1992 = vsel %vm1274, %v1898, %v1991
  %v1993 = vsel %vm1276, %v1907, %v1992
  %v1994 = vsel %vm1264, %v1925, %v1916
  %v1995 = vsel %vm1266, %v1934, %v1994
  %v1996 = vsel %vm1268, %v1943, %v1995
  %v1997 = vsel %vm1270, %v1952, %v1996
  %v1998 = vsel %vm1272, %v1961, %v1997
  %v1999 = vsel %vm1274, %v1970, %v1998
  %v2000 = vsel %vm1276, %v1979, %v1999
  %v2004 = vsel %vm1295, %v1986, 0.0
  %2005 = vadd.xlane.f32.xlu0 %v2004
  %v2006 = vpop.xlane.xlu0 %2005
  %v2007 = vsel %vm1295, %v1993, 0.0
  %2008 = vadd.xlane.f32.xlu0 %v2007
  %v2009 = vpop.xlane.xlu0 %2008
  %v2010 = vsel %vm1295, %v2000, 0.0
  %2011 = vadd.xlane.f32.xlu0 %v2010
  %v2012 = vpop.xlane.xlu0 %2011
  %v2013 = vrcp.pop %v2006
  %v2014 = vrcp.pop %v2009
  %v2015 = vrcp.pop %v2012
  %v2019 = vlaneseq
  %v2020 = vshrl.u32 %v2019, 7
  %v2021 = vsub.s32 0, %v2020
  %v2022 = vrot.slane %v2013, %v2021
  %v2023 = vlaneseq
  %v2024 = vshrl.u32 %v2023, 7
  %v2025 = vsub.s32 1, %v2024
  %v2026 = vrot.slane %v2013, %v2025
  %v2027 = vlaneseq
  %v2028 = vshrl.u32 %v2027, 7
  %v2029 = vsub.s32 2, %v2028
  %v2030 = vrot.slane %v2013, %v2029
  %v2031 = vlaneseq
  %v2032 = vshrl.u32 %v2031, 7
  %v2033 = vsub.s32 3, %v2032
  %v2034 = vrot.slane %v2013, %v2033
  %v2035 = vlaneseq
  %v2036 = vshrl.u32 %v2035, 7
  %v2037 = vsub.s32 4, %v2036
  %v2038 = vrot.slane %v2013, %v2037
  %v2039 = vlaneseq
  %v2040 = vshrl.u32 %v2039, 7
  %v2041 = vsub.s32 5, %v2040
  %v2042 = vrot.slane %v2013, %v2041
  %v2043 = vlaneseq
  %v2044 = vshrl.u32 %v2043, 7
  %v2045 = vsub.s32 6, %v2044
  %v2046 = vrot.slane %v2013, %v2045
  %v2047 = vlaneseq
  %v2048 = vshrl.u32 %v2047, 7
  %v2049 = vsub.s32 7, %v2048
  %v2050 = vrot.slane %v2013, %v2049
  %v2051 = vlaneseq
  %v2052 = vshrl.u32 %v2051, 7
  %v2053 = vsub.s32 0, %v2052
  %v2054 = vrot.slane %v2014, %v2053
  %v2055 = vlaneseq
  %v2056 = vshrl.u32 %v2055, 7
  %v2057 = vsub.s32 1, %v2056
  %v2058 = vrot.slane %v2014, %v2057
  %v2059 = vlaneseq
  %v2060 = vshrl.u32 %v2059, 7
  %v2061 = vsub.s32 2, %v2060
  %v2062 = vrot.slane %v2014, %v2061
  %v2063 = vlaneseq
  %v2064 = vshrl.u32 %v2063, 7
  %v2065 = vsub.s32 3, %v2064
  %v2066 = vrot.slane %v2014, %v2065
  %v2067 = vlaneseq
  %v2068 = vshrl.u32 %v2067, 7
  %v2069 = vsub.s32 4, %v2068
  %v2070 = vrot.slane %v2014, %v2069
  %v2071 = vlaneseq
  %v2072 = vshrl.u32 %v2071, 7
  %v2073 = vsub.s32 5, %v2072
  %v2074 = vrot.slane %v2014, %v2073
  %v2075 = vlaneseq
  %v2076 = vshrl.u32 %v2075, 7
  %v2077 = vsub.s32 6, %v2076
  %v2078 = vrot.slane %v2014, %v2077
  %v2079 = vlaneseq
  %v2080 = vshrl.u32 %v2079, 7
  %v2081 = vsub.s32 7, %v2080
  %v2082 = vrot.slane %v2014, %v2081
  %v2083 = vlaneseq
  %v2084 = vshrl.u32 %v2083, 7
  %v2085 = vsub.s32 0, %v2084
  %v2086 = vrot.slane %v2015, %v2085
  %v2087 = vlaneseq
  %v2088 = vshrl.u32 %v2087, 7
  %v2089 = vsub.s32 1, %v2088
  %v2090 = vrot.slane %v2015, %v2089
  %v2091 = vlaneseq
  %v2092 = vshrl.u32 %v2091, 7
  %v2093 = vsub.s32 2, %v2092
  %v2094 = vrot.slane %v2015, %v2093
  %v2095 = vlaneseq
  %v2096 = vshrl.u32 %v2095, 7
  %v2097 = vsub.s32 3, %v2096
  %v2098 = vrot.slane %v2015, %v2097
  %v2099 = vlaneseq
  %v2100 = vshrl.u32 %v2099, 7
  %v2101 = vsub.s32 4, %v2100
  %v2102 = vrot.slane %v2015, %v2101
  %v2103 = vlaneseq
  %v2104 = vshrl.u32 %v2103, 7
  %v2105 = vsub.s32 5, %v2104
  %v2106 = vrot.slane %v2015, %v2105
  %v2107 = vlaneseq
  %v2108 = vshrl.u32 %v2107, 7
  %v2109 = vsub.s32 6, %v2108
  %v2110 = vrot.slane %v2015, %v2109
  %v2111 = vlaneseq
  %v2112 = vshrl.u32 %v2111, 7
  %v2113 = vsub.s32 7, %v2112
  %v2114 = vrot.slane %v2015, %v2113
  %v2139 = vmul.f32 %v1477, %v2022
  %v2140 = vmul.f32 %v1479, %v2022
  %v2141 = vmul.f32 %v1481, %v2026
  %v2142 = vmul.f32 %v1483, %v2026
  %v2143 = vmul.f32 %v1485, %v2030
  %v2144 = vmul.f32 %v1487, %v2030
  %v2145 = vmul.f32 %v1489, %v2034
  %v2146 = vmul.f32 %v1491, %v2034
  %v2147 = vmul.f32 %v1493, %v2038
  %v2148 = vmul.f32 %v1495, %v2038
  %v2149 = vmul.f32 %v1497, %v2042
  %v2150 = vmul.f32 %v1499, %v2042
  %v2151 = vmul.f32 %v1501, %v2046
  %v2152 = vmul.f32 %v1503, %v2046
  %v2153 = vmul.f32 %v1505, %v2050
  %v2154 = vmul.f32 %v1507, %v2050
  %v2155 = vmul.f32 %v1509, %v2054
  %v2156 = vmul.f32 %v1511, %v2054
  %v2157 = vmul.f32 %v1513, %v2058
  %v2158 = vmul.f32 %v1515, %v2058
  %v2159 = vmul.f32 %v1517, %v2062
  %v2160 = vmul.f32 %v1519, %v2062
  %v2161 = vmul.f32 %v1521, %v2066
  %v2162 = vmul.f32 %v1523, %v2066
  %v2163 = vmul.f32 %v1525, %v2070
  %v2164 = vmul.f32 %v1527, %v2070
  %v2165 = vmul.f32 %v1529, %v2074
  %v2166 = vmul.f32 %v1531, %v2074
  %v2167 = vmul.f32 %v1533, %v2078
  %v2168 = vmul.f32 %v1535, %v2078
  %v2169 = vmul.f32 %v1537, %v2082
  %v2170 = vmul.f32 %v1539, %v2082
  %v2171 = vmul.f32 %v1541, %v2086
  %v2172 = vmul.f32 %v1543, %v2086
  %v2173 = vmul.f32 %v1545, %v2090
  %v2174 = vmul.f32 %v1547, %v2090
  %v2175 = vmul.f32 %v1549, %v2094
  %v2176 = vmul.f32 %v1551, %v2094
  %v2177 = vmul.f32 %v1553, %v2098
  %v2178 = vmul.f32 %v1555, %v2098
  %v2179 = vmul.f32 %v1557, %v2102
  %v2180 = vmul.f32 %v1559, %v2102
  %v2181 = vmul.f32 %v1561, %v2106
  %v2182 = vmul.f32 %v1563, %v2106
  %v2183 = vmul.f32 %v1565, %v2110
  %v2184 = vmul.f32 %v1567, %v2110
  %v2185 = vmul.f32 %v1569, %v2114
  %v2186 = vmul.f32 %v1571, %v2114
  %2188 = vset.pattern.permute.xlu0 0
  %2189 = vperm.xlu0 %2188, %v2139
  %v2190 = vpop.permute.xlu0 %2189
  %2193 = vset.pattern.permute.xlu0 0
  %2194 = vperm.xlu0 %2193, %v2140
  %v2195 = vpop.permute.xlu0 %2194
  %2198 = vset.pattern.permute.xlu0 0
  %2199 = vperm.xlu0 %2198, %v2141
  %v2200 = vpop.permute.xlu0 %2199
  %2203 = vset.pattern.permute.xlu0 0
  %2204 = vperm.xlu0 %2203, %v2142
  %v2205 = vpop.permute.xlu0 %2204
  %2208 = vset.pattern.permute.xlu0 0
  %2209 = vperm.xlu0 %2208, %v2143
  %v2210 = vpop.permute.xlu0 %2209
  %2213 = vset.pattern.permute.xlu0 0
  %2214 = vperm.xlu0 %2213, %v2144
  %v2215 = vpop.permute.xlu0 %2214
  %2218 = vset.pattern.permute.xlu0 0
  %2219 = vperm.xlu0 %2218, %v2145
  %v2220 = vpop.permute.xlu0 %2219
  %2223 = vset.pattern.permute.xlu0 0
  %2224 = vperm.xlu0 %2223, %v2146
  %v2225 = vpop.permute.xlu0 %2224
  %2228 = vset.pattern.permute.xlu0 0
  %2229 = vperm.xlu0 %2228, %v2147
  %v2230 = vpop.permute.xlu0 %2229
  %2233 = vset.pattern.permute.xlu0 0
  %2234 = vperm.xlu0 %2233, %v2148
  %v2235 = vpop.permute.xlu0 %2234
  %2238 = vset.pattern.permute.xlu0 0
  %2239 = vperm.xlu0 %2238, %v2149
  %v2240 = vpop.permute.xlu0 %2239
  %2243 = vset.pattern.permute.xlu0 0
  %2244 = vperm.xlu0 %2243, %v2150
  %v2245 = vpop.permute.xlu0 %2244
  %2248 = vset.pattern.permute.xlu0 0
  %2249 = vperm.xlu0 %2248, %v2151
  %v2250 = vpop.permute.xlu0 %2249
  %2253 = vset.pattern.permute.xlu0 0
  %2254 = vperm.xlu0 %2253, %v2152
  %v2255 = vpop.permute.xlu0 %2254
  %2258 = vset.pattern.permute.xlu0 0
  %2259 = vperm.xlu0 %2258, %v2153
  %v2260 = vpop.permute.xlu0 %2259
  %2263 = vset.pattern.permute.xlu0 0
  %2264 = vperm.xlu0 %2263, %v2154
  %v2265 = vpop.permute.xlu0 %2264
  %2268 = vset.pattern.permute.xlu0 0
  %2269 = vperm.xlu0 %2268, %v2155
  %v2270 = vpop.permute.xlu0 %2269
  %2273 = vset.pattern.permute.xlu0 0
  %2274 = vperm.xlu0 %2273, %v2156
  %v2275 = vpop.permute.xlu0 %2274
  %2278 = vset.pattern.permute.xlu0 0
  %2279 = vperm.xlu0 %2278, %v2157
  %v2280 = vpop.permute.xlu0 %2279
  %2283 = vset.pattern.permute.xlu0 0
  %2284 = vperm.xlu0 %2283, %v2158
  %v2285 = vpop.permute.xlu0 %2284
  %2288 = vset.pattern.permute.xlu0 0
  %2289 = vperm.xlu0 %2288, %v2159
  %v2290 = vpop.permute.xlu0 %2289
  %2293 = vset.pattern.permute.xlu0 0
  %2294 = vperm.xlu0 %2293, %v2160
  %v2295 = vpop.permute.xlu0 %2294
  %2298 = vset.pattern.permute.xlu0 0
  %2299 = vperm.xlu0 %2298, %v2161
  %v2300 = vpop.permute.xlu0 %2299
  %2303 = vset.pattern.permute.xlu0 0
  %2304 = vperm.xlu0 %2303, %v2162
  %v2305 = vpop.permute.xlu0 %2304
  %2308 = vset.pattern.permute.xlu0 0
  %2309 = vperm.xlu0 %2308, %v2163
  %v2310 = vpop.permute.xlu0 %2309
  %2313 = vset.pattern.permute.xlu0 0
  %2314 = vperm.xlu0 %2313, %v2164
  %v2315 = vpop.permute.xlu0 %2314
  %2318 = vset.pattern.permute.xlu0 0
  %2319 = vperm.xlu0 %2318, %v2165
  %v2320 = vpop.permute.xlu0 %2319
  %2323 = vset.pattern.permute.xlu0 0
  %2324 = vperm.xlu0 %2323, %v2166
  %v2325 = vpop.permute.xlu0 %2324
  %2328 = vset.pattern.permute.xlu0 0
  %2329 = vperm.xlu0 %2328, %v2167
  %v2330 = vpop.permute.xlu0 %2329
  %2333 = vset.pattern.permute.xlu0 0
  %2334 = vperm.xlu0 %2333, %v2168
  %v2335 = vpop.permute.xlu0 %2334
  %2338 = vset.pattern.permute.xlu0 0
  %2339 = vperm.xlu0 %2338, %v2169
  %v2340 = vpop.permute.xlu0 %2339
  %2343 = vset.pattern.permute.xlu0 0
  %2344 = vperm.xlu0 %2343, %v2170
  %v2345 = vpop.permute.xlu0 %2344
  %2348 = vset.pattern.permute.xlu0 0
  %2349 = vperm.xlu0 %2348, %v2171
  %v2350 = vpop.permute.xlu0 %2349
  %2353 = vset.pattern.permute.xlu0 0
  %2354 = vperm.xlu0 %2353, %v2172
  %v2355 = vpop.permute.xlu0 %2354
  %2358 = vset.pattern.permute.xlu0 0
  %2359 = vperm.xlu0 %2358, %v2173
  %v2360 = vpop.permute.xlu0 %2359
  %2363 = vset.pattern.permute.xlu0 0
  %2364 = vperm.xlu0 %2363, %v2174
  %v2365 = vpop.permute.xlu0 %2364
  %2368 = vset.pattern.permute.xlu0 0
  %2369 = vperm.xlu0 %2368, %v2175
  %v2370 = vpop.permute.xlu0 %2369
  %2373 = vset.pattern.permute.xlu0 0
  %2374 = vperm.xlu0 %2373, %v2176
  %v2375 = vpop.permute.xlu0 %2374
  %2378 = vset.pattern.permute.xlu0 0
  %2379 = vperm.xlu0 %2378, %v2177
  %v2380 = vpop.permute.xlu0 %2379
  %2383 = vset.pattern.permute.xlu0 0
  %2384 = vperm.xlu0 %2383, %v2178
  %v2385 = vpop.permute.xlu0 %2384
  %2388 = vset.pattern.permute.xlu0 0
  %2389 = vperm.xlu0 %2388, %v2179
  %v2390 = vpop.permute.xlu0 %2389
  %2393 = vset.pattern.permute.xlu0 0
  %2394 = vperm.xlu0 %2393, %v2180
  %v2395 = vpop.permute.xlu0 %2394
  %2398 = vset.pattern.permute.xlu0 0
  %2399 = vperm.xlu0 %2398, %v2181
  %v2400 = vpop.permute.xlu0 %2399
  %2403 = vset.pattern.permute.xlu0 0
  %2404 = vperm.xlu0 %2403, %v2182
  %v2405 = vpop.permute.xlu0 %2404
  %2408 = vset.pattern.permute.xlu0 0
  %2409 = vperm.xlu0 %2408, %v2183
  %v2410 = vpop.permute.xlu0 %2409
  %2413 = vset.pattern.permute.xlu0 0
  %2414 = vperm.xlu0 %2413, %v2184
  %v2415 = vpop.permute.xlu0 %2414
  %2418 = vset.pattern.permute.xlu0 0
  %2419 = vperm.xlu0 %2418, %v2185
  %v2420 = vpop.permute.xlu0 %2419
  %2423 = vset.pattern.permute.xlu0 0
  %2424 = vperm.xlu0 %2423, %v2186
  %v2425 = vpop.permute.xlu0 %2424
  %v2427 = vmul.f32 %v2190, %v799
  %v2428 = vmul.f32 %v2195, %v800
  %v2429 = vmul.f32 %v2200, %v801
  %v2430 = vmul.f32 %v2205, %v802
  %v2431 = vmul.f32 %v2210, %v803
  %v2432 = vmul.f32 %v2215, %v804
  %v2433 = vmul.f32 %v2220, %v805
  %v2434 = vmul.f32 %v2225, %v806
  %v2435 = vmul.f32 %v2230, %v807
  %v2436 = vmul.f32 %v2235, %v808
  %v2437 = vmul.f32 %v2240, %v809
  %v2438 = vmul.f32 %v2245, %v810
  %v2439 = vmul.f32 %v2250, %v811
  %v2440 = vmul.f32 %v2255, %v812
  %v2441 = vmul.f32 %v2260, %v813
  %v2442 = vmul.f32 %v2265, %v814
  %v2443 = vmul.f32 %v2270, %v815
  %v2444 = vmul.f32 %v2275, %v816
  %v2445 = vmul.f32 %v2280, %v817
  %v2446 = vmul.f32 %v2285, %v818
  %v2447 = vmul.f32 %v2290, %v819
  %v2448 = vmul.f32 %v2295, %v820
  %v2449 = vmul.f32 %v2300, %v821
  %v2450 = vmul.f32 %v2305, %v822
  %v2451 = vmul.f32 %v2310, %v823
  %v2452 = vmul.f32 %v2315, %v824
  %v2453 = vmul.f32 %v2320, %v825
  %v2454 = vmul.f32 %v2325, %v826
  %v2455 = vmul.f32 %v2330, %v827
  %v2456 = vmul.f32 %v2335, %v828
  %v2457 = vmul.f32 %v2340, %v829
  %v2458 = vmul.f32 %v2345, %v830
  %v2459 = vmul.f32 %v2350, %v831
  %v2460 = vmul.f32 %v2355, %v832
  %v2461 = vmul.f32 %v2360, %v833
  %v2462 = vmul.f32 %v2365, %v834
  %v2463 = vmul.f32 %v2370, %v835
  %v2464 = vmul.f32 %v2375, %v836
  %v2465 = vmul.f32 %v2380, %v837
  %v2466 = vmul.f32 %v2385, %v838
  %v2467 = vmul.f32 %v2390, %v839
  %v2468 = vmul.f32 %v2395, %v840
  %v2469 = vmul.f32 %v2400, %v841
  %v2470 = vmul.f32 %v2405, %v842
  %v2471 = vmul.f32 %v2410, %v843
  %v2472 = vmul.f32 %v2415, %v844
  %v2473 = vmul.f32 %v2420, %v845
  %v2474 = vmul.f32 %v2425, %v846
  %v2475 = vadd.f32 %v2427, %v2428
  %v2476 = vrot.slane %v2475, 4
  %v2477 = vadd.f32 %v2475, %v2476
  %v2478 = vrot.slane %v2477, 2
  %v2479 = vadd.f32 %v2477, %v2478
  %v2480 = vrot.slane %v2479, 1
  %v2481 = vadd.f32 %v2479, %v2480
  %v2482 = vadd.f32 %v2429, %v2430
  %v2483 = vrot.slane %v2482, 4
  %v2484 = vadd.f32 %v2482, %v2483
  %v2485 = vrot.slane %v2484, 2
  %v2486 = vadd.f32 %v2484, %v2485
  %v2487 = vrot.slane %v2486, 1
  %v2488 = vadd.f32 %v2486, %v2487
  %v2489 = vadd.f32 %v2431, %v2432
  %v2490 = vrot.slane %v2489, 4
  %v2491 = vadd.f32 %v2489, %v2490
  %v2492 = vrot.slane %v2491, 2
  %v2493 = vadd.f32 %v2491, %v2492
  %v2494 = vrot.slane %v2493, 1
  %v2495 = vadd.f32 %v2493, %v2494
  %v2496 = vadd.f32 %v2433, %v2434
  %v2497 = vrot.slane %v2496, 4
  %v2498 = vadd.f32 %v2496, %v2497
  %v2499 = vrot.slane %v2498, 2
  %v2500 = vadd.f32 %v2498, %v2499
  %v2501 = vrot.slane %v2500, 1
  %v2502 = vadd.f32 %v2500, %v2501
  %v2503 = vadd.f32 %v2435, %v2436
  %v2504 = vrot.slane %v2503, 4
  %v2505 = vadd.f32 %v2503, %v2504
  %v2506 = vrot.slane %v2505, 2
  %v2507 = vadd.f32 %v2505, %v2506
  %v2508 = vrot.slane %v2507, 1
  %v2509 = vadd.f32 %v2507, %v2508
  %v2510 = vadd.f32 %v2437, %v2438
  %v2511 = vrot.slane %v2510, 4
  %v2512 = vadd.f32 %v2510, %v2511
  %v2513 = vrot.slane %v2512, 2
  %v2514 = vadd.f32 %v2512, %v2513
  %v2515 = vrot.slane %v2514, 1
  %v2516 = vadd.f32 %v2514, %v2515
  %v2517 = vadd.f32 %v2439, %v2440
  %v2518 = vrot.slane %v2517, 4
  %v2519 = vadd.f32 %v2517, %v2518
  %v2520 = vrot.slane %v2519, 2
  %v2521 = vadd.f32 %v2519, %v2520
  %v2522 = vrot.slane %v2521, 1
  %v2523 = vadd.f32 %v2521, %v2522
  %v2524 = vadd.f32 %v2441, %v2442
  %v2525 = vrot.slane %v2524, 4
  %v2526 = vadd.f32 %v2524, %v2525
  %v2527 = vrot.slane %v2526, 2
  %v2528 = vadd.f32 %v2526, %v2527
  %v2529 = vrot.slane %v2528, 1
  %v2530 = vadd.f32 %v2528, %v2529
  %v2531 = vadd.f32 %v2443, %v2444
  %v2532 = vrot.slane %v2531, 4
  %v2533 = vadd.f32 %v2531, %v2532
  %v2534 = vrot.slane %v2533, 2
  %v2535 = vadd.f32 %v2533, %v2534
  %v2536 = vrot.slane %v2535, 1
  %v2537 = vadd.f32 %v2535, %v2536
  %v2538 = vadd.f32 %v2445, %v2446
  %v2539 = vrot.slane %v2538, 4
  %v2540 = vadd.f32 %v2538, %v2539
  %v2541 = vrot.slane %v2540, 2
  %v2542 = vadd.f32 %v2540, %v2541
  %v2543 = vrot.slane %v2542, 1
  %v2544 = vadd.f32 %v2542, %v2543
  %v2545 = vadd.f32 %v2447, %v2448
  %v2546 = vrot.slane %v2545, 4
  %v2547 = vadd.f32 %v2545, %v2546
  %v2548 = vrot.slane %v2547, 2
  %v2549 = vadd.f32 %v2547, %v2548
  %v2550 = vrot.slane %v2549, 1
  %v2551 = vadd.f32 %v2549, %v2550
  %v2552 = vadd.f32 %v2449, %v2450
  %v2553 = vrot.slane %v2552, 4
  %v2554 = vadd.f32 %v2552, %v2553
  %v2555 = vrot.slane %v2554, 2
  %v2556 = vadd.f32 %v2554, %v2555
  %v2557 = vrot.slane %v2556, 1
  %v2558 = vadd.f32 %v2556, %v2557
  %v2559 = vadd.f32 %v2451, %v2452
  %v2560 = vrot.slane %v2559, 4
  %v2561 = vadd.f32 %v2559, %v2560
  %v2562 = vrot.slane %v2561, 2
  %v2563 = vadd.f32 %v2561, %v2562
  %v2564 = vrot.slane %v2563, 1
  %v2565 = vadd.f32 %v2563, %v2564
  %v2566 = vadd.f32 %v2453, %v2454
  %v2567 = vrot.slane %v2566, 4
  %v2568 = vadd.f32 %v2566, %v2567
  %v2569 = vrot.slane %v2568, 2
  %v2570 = vadd.f32 %v2568, %v2569
  %v2571 = vrot.slane %v2570, 1
  %v2572 = vadd.f32 %v2570, %v2571
  %v2573 = vadd.f32 %v2455, %v2456
  %v2574 = vrot.slane %v2573, 4
  %v2575 = vadd.f32 %v2573, %v2574
  %v2576 = vrot.slane %v2575, 2
  %v2577 = vadd.f32 %v2575, %v2576
  %v2578 = vrot.slane %v2577, 1
  %v2579 = vadd.f32 %v2577, %v2578
  %v2580 = vadd.f32 %v2457, %v2458
  %v2581 = vrot.slane %v2580, 4
  %v2582 = vadd.f32 %v2580, %v2581
  %v2583 = vrot.slane %v2582, 2
  %v2584 = vadd.f32 %v2582, %v2583
  %v2585 = vrot.slane %v2584, 1
  %v2586 = vadd.f32 %v2584, %v2585
  %v2587 = vadd.f32 %v2459, %v2460
  %v2588 = vrot.slane %v2587, 4
  %v2589 = vadd.f32 %v2587, %v2588
  %v2590 = vrot.slane %v2589, 2
  %v2591 = vadd.f32 %v2589, %v2590
  %v2592 = vrot.slane %v2591, 1
  %v2593 = vadd.f32 %v2591, %v2592
  %v2594 = vadd.f32 %v2461, %v2462
  %v2595 = vrot.slane %v2594, 4
  %v2596 = vadd.f32 %v2594, %v2595
  %v2597 = vrot.slane %v2596, 2
  %v2598 = vadd.f32 %v2596, %v2597
  %v2599 = vrot.slane %v2598, 1
  %v2600 = vadd.f32 %v2598, %v2599
  %v2601 = vadd.f32 %v2463, %v2464
  %v2602 = vrot.slane %v2601, 4
  %v2603 = vadd.f32 %v2601, %v2602
  %v2604 = vrot.slane %v2603, 2
  %v2605 = vadd.f32 %v2603, %v2604
  %v2606 = vrot.slane %v2605, 1
  %v2607 = vadd.f32 %v2605, %v2606
  %v2608 = vadd.f32 %v2465, %v2466
  %v2609 = vrot.slane %v2608, 4
  %v2610 = vadd.f32 %v2608, %v2609
  %v2611 = vrot.slane %v2610, 2
  %v2612 = vadd.f32 %v2610, %v2611
  %v2613 = vrot.slane %v2612, 1
  %v2614 = vadd.f32 %v2612, %v2613
  %v2615 = vadd.f32 %v2467, %v2468
  %v2616 = vrot.slane %v2615, 4
  %v2617 = vadd.f32 %v2615, %v2616
  %v2618 = vrot.slane %v2617, 2
  %v2619 = vadd.f32 %v2617, %v2618
  %v2620 = vrot.slane %v2619, 1
  %v2621 = vadd.f32 %v2619, %v2620
  %v2622 = vadd.f32 %v2469, %v2470
  %v2623 = vrot.slane %v2622, 4
  %v2624 = vadd.f32 %v2622, %v2623
  %v2625 = vrot.slane %v2624, 2
  %v2626 = vadd.f32 %v2624, %v2625
  %v2627 = vrot.slane %v2626, 1
  %v2628 = vadd.f32 %v2626, %v2627
  %v2629 = vadd.f32 %v2471, %v2472
  %v2630 = vrot.slane %v2629, 4
  %v2631 = vadd.f32 %v2629, %v2630
  %v2632 = vrot.slane %v2631, 2
  %v2633 = vadd.f32 %v2631, %v2632
  %v2634 = vrot.slane %v2633, 1
  %v2635 = vadd.f32 %v2633, %v2634
  %v2636 = vadd.f32 %v2473, %v2474
  %v2637 = vrot.slane %v2636, 4
  %v2638 = vadd.f32 %v2636, %v2637
  %v2639 = vrot.slane %v2638, 2
  %v2640 = vadd.f32 %v2638, %v2639
  %v2641 = vrot.slane %v2640, 1
  %v2642 = vadd.f32 %v2640, %v2641
  %v2667 = vsel %vm1264, %v2488, %v2481
  %v2668 = vsel %vm1266, %v2495, %v2667
  %v2669 = vsel %vm1268, %v2502, %v2668
  %v2670 = vsel %vm1270, %v2509, %v2669
  %v2671 = vsel %vm1272, %v2516, %v2670
  %v2672 = vsel %vm1274, %v2523, %v2671
  %v2673 = vsel %vm1276, %v2530, %v2672
  %v2674 = vsel %vm1264, %v2544, %v2537
  %v2675 = vsel %vm1266, %v2551, %v2674
  %v2676 = vsel %vm1268, %v2558, %v2675
  %v2677 = vsel %vm1270, %v2565, %v2676
  %v2678 = vsel %vm1272, %v2572, %v2677
  %v2679 = vsel %vm1274, %v2579, %v2678
  %v2680 = vsel %vm1276, %v2586, %v2679
  %v2681 = vsel %vm1264, %v2600, %v2593
  %v2682 = vsel %vm1266, %v2607, %v2681
  %v2683 = vsel %vm1268, %v2614, %v2682
  %v2684 = vsel %vm1270, %v2621, %v2683
  %v2685 = vsel %vm1272, %v2628, %v2684
  %v2686 = vsel %vm1274, %v2635, %v2685
  %v2687 = vsel %vm1276, %v2642, %v2686
  %2691 = vst [vmem:[%s4] sm:$0xff] %v2673
  %2692 = vst [vmem:[%s4 + $0x8] sm:$0xff] %v2680
  %2693 = vst [vmem:[%s4 + $0x10] sm:$0xff] %v2687
  // Predicated region
  $region18: #{_lambda_.2} parent=0 // pred_check
    _
  $region19: #{_lambda_.2} parent=0 // pred_check_branch
    %2695 = sbr.rel (0) target = $region21
  $region20: #{_lambda_.2} parent=0 // pred_region
    _
  $region21: #{_lambda_.2} parent=0 // pred_fallthru
    _
  // Predicated region
  $region22: #{_lambda_.2} parent=0 // pred_check
    _
  $region23: #{_lambda_.2} parent=0 // pred_check_branch
    %2697 = sbr.rel (0) target = $region25
  $region24: #{_lambda_.2} parent=0 // pred_region
    _
  $region25: #{_lambda_.2} parent=0 // pred_fallthru
    _

</llo_original>
